<compile_context>
chip_gen: v5e
topology: v5e:2x2
jax: 0.10.0
libtpu: 0.0.40
codegen_flags: <defaults>
</compile_context>

<pallas_src>
import functools

import jax
import jax.numpy as jnp
from jax import lax
from jax.experimental import pallas as pl
from jax.experimental.pallas import tpu as pltpu


def _map_loss_kernel(x_ref, tcol_ref, trow_ref, out_ref,
                     sm_ref, gt_ref, diag_ref, ap_ref, *, inv_2k, block_a):
    blk = pl.program_id(0)          # grid axis = block of ranking positions "a"
    n = sm_ref.shape[0]

    # ---- one-time setup (first grid step): similarity matrix, gt, diag, ap --
    @pl.when(blk == 0)
    def _init():
        x = x_ref[...].astype(jnp.float32)                               # (N, D)
        norm = jnp.maximum(
            jnp.sqrt(jnp.sum(x * x, axis=-1, keepdims=True)), 1e-8)
        xn = x / norm
        # xn @ xn.T on the MXU (contract the feature axis of both operands).
        sm = lax.dot_general(xn, xn, (((1,), (1,)), ((), ())),
                             preferred_element_type=jnp.float32)         # (N, N)
        sm_ref[...] = sm
        # off-diagonal mask built ONCE here — never inside the per-step loop.
        row_i = lax.broadcasted_iota(jnp.int32, (n, n), 0)
        col_i = lax.broadcasted_iota(jnp.int32, (n, n), 1)
        offdiag = row_i != col_i
        same = (tcol_ref[...] == trow_ref[...]).astype(jnp.float32)      # (N, N)
        gt_ref[...] = jnp.where(offdiag, same, 0.0)                      # zero diag
        # cache sm's diagonal as a (1, N) row for the per-step b == i correction
        diag_ref[...] = jnp.sum(jnp.where(offdiag, 0.0, sm),
                                axis=0, keepdims=True)
        ap_ref[...] = jnp.zeros_like(ap_ref)

    # Resident tiles, loaded once per grid step and reused across the block.
    sm = sm_ref[...]        # symmetric: element [b, i] == sm[i, b]
    gt = gt_ref[...]        # symmetric, zero diagonal
    diag = diag_ref[...]    # (1, N): diag[0, i] == sm[i, i]

    a0 = pl.multiple_of(blk * block_a, block_a)

    def body(t, ap_acc):
        a = a0 + t
        # columns of sm / gt via symmetry: row `a` == column `a`
        sm_a = sm_ref[pl.ds(a, 1), :]                                    # (1, N)
        gt_a = gt_ref[pl.ds(a, 1), :]                                    # (1, N)
        # ind[b, i] = sigmoid((sm[i, b] - sm[i, a]) / k) as 0.5*(1 + tanh(.))
        ind = 0.5 * (1.0 + jnp.tanh((sm - sm_a) * inv_2k))               # (N, N)
        acc_gt = jnp.sum(gt * ind, axis=0, keepdims=True)                # (1, N)
        # sum over b != i  ==  sum over all b  minus the cached b == i term
        diag_term = 0.5 * (1.0 + jnp.tanh((diag - sm_a) * inv_2k))       # (1, N)
        ind_sum = jnp.sum(ind, axis=0, keepdims=True) - diag_term + 0.5  # (1, N)
        prec = acc_gt * pl.reciprocal(ind_sum, approx=True)              # (1, N)
        # ap[i] += gt[i, a] * prec[i, a]   (a == i contributes 0: gt diag is 0)
        return ap_acc + gt_a * prec

    ap_blk = lax.fori_loop(0, block_a, body,
                           jnp.zeros((1, n), jnp.float32), unroll=True)
    ap_ref[...] += ap_blk

    # ---- finalize on the last grid step ------------------------------------
    @pl.when(blk == pl.num_programs(0) - 1)
    def _final():
        gt_all = gt_ref[...]
        num_pos = jnp.sum(gt_all, axis=0, keepdims=True)                 # (1, N)
        relevant = num_pos > 0.0
        ap = ap_ref[...]
        # exact (cold-path) divides here to keep full precision in the result
        ap_norm = jnp.where(relevant,
                            ap / jnp.where(relevant, num_pos, 1.0), 0.0)
        count = jnp.sum(relevant.astype(jnp.float32))
        # NOTE: count == 0 (no positives anywhere) yields NaN, same as PyTorch.
        out_ref[0, 0] = 1.0 - jnp.sum(ap_norm) / count


def _pick_block_a(n):
    # Small batches: one grid step (amortizes the ~0.35us/step overhead and the
    # sm/gt reloads).  Larger batches: a divisor of n so every position is hit.
    if n <= 32:
        return n
    for ta in (16, 8, 4, 2):
        if n % ta == 0:
            return ta
    return 1


def map_loss_pallas(x, target, k=1e-3, block_a=None):
    n, d = x.shape
    ta = _pick_block_a(n) if block_a is None else block_a
    assert n % ta == 0, "block_a must divide the batch size"
    t_col = target.reshape(n, 1).astype(jnp.int32)
    t_row = target.reshape(1, n).astype(jnp.int32)

    # VMEM budget: 2 f32 (N,N) scratches + small rows + double-buffered inputs.
    # NOTE: for very large N (esp. v7x's 64 MiB VMEM) the row axis should also
    # be tiled so scratch becomes linear in N and the 2nd TensorCore is used.
    vmem_bytes = 4 * (2 * n * n + 4 * n + 2 * n * d) + (4 << 20)
    vmem_limit = int(min(max(vmem_bytes, 32 << 20), 100 << 20))

    out = pl.pallas_call(
        functools.partial(_map_loss_kernel, inv_2k=0.5 / k, block_a=ta),
        out_shape=jax.ShapeDtypeStruct((1, 1), jnp.float32),
        grid_spec=pltpu.PrefetchScalarGridSpec(
            num_scalar_prefetch=0,
            grid=(n // ta,),
            in_specs=[
                pl.BlockSpec((n, d), lambda b: (0, 0)),
                pl.BlockSpec((n, 1), lambda b: (0, 0)),
                pl.BlockSpec((1, n), lambda b: (0, 0)),
            ],
            out_specs=pl.BlockSpec(memory_space=pltpu.MemorySpace.SMEM),
            scratch_shapes=[
                pltpu.VMEM((n, n), jnp.float32),   # cosine-similarity matrix
                pltpu.VMEM((n, n), jnp.float32),   # gt (diag-masked)
                pltpu.VMEM((1, n), jnp.float32),   # sm diagonal (row layout)
                pltpu.VMEM((1, n), jnp.float32),   # running ap accumulator
            ],
        ),
        compiler_params=pltpu.CompilerParams(
            dimension_semantics=("arbitrary",),
            vmem_limit_bytes=vmem_limit),
    )(x, t_col, t_row)
    return out[0, 0]


def map_loss_ref(x, target, k=1e-3):
    """Pure-JAX reference mirroring the PyTorch code (for verification)."""
    x = x.astype(jnp.float32)
    n = x.shape[0]
    xn = x / jnp.maximum(jnp.linalg.norm(x, axis=-1, keepdims=True), 1e-8)
    sm = xn @ xn.T
    eye = jnp.eye(n, dtype=bool)
    offdiag = (~eye).astype(jnp.float32)
    gt = (target[None, :] == target[:, None]).astype(jnp.float32) * offdiag
    diff = sm[:, None, :] - sm[:, :, None]          # [i, a, b] = sm[i,b]-sm[i,a]
    ind = 1.0 / (1.0 + jnp.exp(-diff / k))
    acc_gt = jnp.sum(gt[:, None, :] * ind, axis=-1)
    ind_sum = jnp.sum(offdiag[:, None, :] * ind, axis=-1) + 0.5
    prec = acc_gt / ind_sum
    ap = jnp.sum(gt * prec, axis=1)
    num_pos = jnp.sum(gt, axis=1)
    relevant = num_pos > 0
    ap_norm = jnp.where(relevant, ap / jnp.where(relevant, num_pos, 1.0), 0.0)
    return 1.0 - jnp.sum(ap_norm) / jnp.sum(relevant.astype(jnp.float32))


if __name__ == "__main__":
    key = jax.random.PRNGKey(0)
    kx, kt = jax.random.split(key)
    N, D = 16, 32                                  # batch of 16 embeddings, dim 32
    x = jax.random.normal(kx, (N, D), dtype=jnp.float32)
    target = jax.random.randint(kt, (N,), 0, 4, dtype=jnp.int32)

    loss = jax.block_until_ready(map_loss_pallas(x, target, k=1e-3))
    ref = jax.block_until_ready(map_loss_ref(x, target, k=1e-3))
    # tolerance leaves headroom for the approx-reciprocal fast path in prec
    assert jnp.allclose(loss, ref, atol=5e-4), (loss, ref)
    print("KERNEL_OK")
</pallas_src>

<mosaic_0001>
module attributes {stable_mosaic.version = 11 : i64} {
  func.func @_map_loss_kernel(%arg0: i32, %arg1: memref<16x32xf32, #tpu.memory_space<vmem>>, %arg2: memref<16x1xi32, #tpu.memory_space<vmem>>, %arg3: memref<1x16xi32, #tpu.memory_space<vmem>>, %arg4: memref<1x1xf32, #tpu.memory_space<smem>>, %arg5: memref<16x16xf32, #tpu.memory_space<vmem>>, %arg6: memref<16x16xf32, #tpu.memory_space<vmem>>, %arg7: memref<1x16xf32, #tpu.memory_space<vmem>>, %arg8: memref<1x16xf32, #tpu.memory_space<vmem>>) attributes {dimension_semantics = [#tpu.dimension_semantics<arbitrary>], iteration_bounds = array<i64: 1>, scalar_prefetch = 0 : i64, scratch_operands = 4 : i64, tpu.core_type = #tpu.core_type<tc>, window_params = [{pipeline_mode = #tpu.pipeline_mode<synchronous>, transform_indices = @transform_0, window_bounds = array<i64: 16, 32>}, {pipeline_mode = #tpu.pipeline_mode<synchronous>, transform_indices = @transform_1, window_bounds = array<i64: 16, 1>}, {pipeline_mode = #tpu.pipeline_mode<synchronous>, transform_indices = @transform_2, window_bounds = array<i64: 1, 16>}, {transform_indices = @transform_3, window_bounds = array<i64: 1, 1>}]} {
    %c0_i32 = arith.constant 0 : i32
    %0 = arith.cmpi eq, %arg0, %c0_i32 : i32
    %1 = arith.extui %0 : i1 to i32
    %c0_i32_0 = arith.constant 0 : i32
    %2 = arith.cmpi ne, %1, %c0_i32_0 : i32
    scf.if %2 {
      %c0_190 = arith.constant 0 : index
      %c0_191 = arith.constant 0 : index
      %559 = vector.load %arg1[%c0_190, %c0_191] : memref<16x32xf32, #tpu.memory_space<vmem>>, vector<16x32xf32>
      %560 = arith.mulf %559, %559 : vector<16x32xf32>
      %cst_192 = arith.constant dense<0.000000e+00> : vector<16xf32>
      %561 = vector.multi_reduction <add>, %560, %cst_192 [1] : vector<16x32xf32> to vector<16xf32>
      %562 = vector.shape_cast %561 : vector<16xf32> to vector<16x1xf32>
      %563 = math.sqrt %562 : vector<16x1xf32>
      %cst_193 = arith.constant 9.99999993E-9 : f32
      %564 = vector.broadcast %cst_193 : f32 to vector<16x1xf32>
      %565 = arith.maximumf %563, %564 : vector<16x1xf32>
      %566 = vector.broadcast %565 : vector<16x1xf32> to vector<16x32xf32>
      %567 = arith.divf %559, %566 : vector<16x32xf32>
      %cst_194 = arith.constant dense<0.000000e+00> : vector<16x16xf32>
      %568 = tpu.matmul %567, %567, %cst_194 {dimension_numbers = #tpu.dot_dimension_numbers<[1], [1], [0], [0], [0, 0, 1, 0], [], []>} : vector<16x32xf32>, vector<16x32xf32>, vector<16x16xf32> -> vector<16x16xf32>
      %c0_195 = arith.constant 0 : index
      %c0_196 = arith.constant 0 : index
      %569 = vector.load %arg5[%c0_195, %c0_196] : memref<16x16xf32, #tpu.memory_space<vmem>>, vector<16x16xf32>
      tpu.vector_store %arg5[%c0_195, %c0_196], %568 {strides = array<i32>} : memref<16x16xf32, #tpu.memory_space<vmem>>, vector<16x16xf32>,
      %570 = tpu.iota {dimensions = array<i32: 0>} : vector<16x16xi32>
      %571 = tpu.iota {dimensions = array<i32: 1>} : vector<16x16xi32>
      %572 = arith.cmpi ne, %570, %571 : vector<16x16xi32>
      %c0_197 = arith.constant 0 : index
      %c0_198 = arith.constant 0 : index
      %573 = vector.load %arg2[%c0_197, %c0_198] : memref<16x1xi32, #tpu.memory_space<vmem>>, vector<16x1xi32>
      %c0_199 = arith.constant 0 : index
      %c0_200 = arith.constant 0 : index
      %574 = vector.load %arg3[%c0_199, %c0_200] : memref<1x16xi32, #tpu.memory_space<vmem>>, vector<1x16xi32>
      %575 = vector.broadcast %573 : vector<16x1xi32> to vector<16x16xi32>
      %576 = vector.broadcast %574 : vector<1x16xi32> to vector<16x16xi32>
      %577 = arith.cmpi eq, %575, %576 : vector<16x16xi32>
      %578 = arith.extui %577 : vector<16x16xi1> to vector<16x16xi32>
      %579 = arith.sitofp %578 : vector<16x16xi32> to vector<16x16xf32>
      %cst_201 = arith.constant 0.000000e+00 : f32
      %580 = vector.broadcast %cst_201 : f32 to vector<16x16xf32>
      %581 = arith.select %572, %579, %580 : vector<16x16xi1>, vector<16x16xf32>
      %c0_202 = arith.constant 0 : index
      %c0_203 = arith.constant 0 : index
      %582 = vector.load %arg6[%c0_202, %c0_203] : memref<16x16xf32, #tpu.memory_space<vmem>>, vector<16x16xf32>
      tpu.vector_store %arg6[%c0_202, %c0_203], %581 {strides = array<i32>} : memref<16x16xf32, #tpu.memory_space<vmem>>, vector<16x16xf32>,
      %cst_204 = arith.constant 0.000000e+00 : f32
      %583 = vector.broadcast %cst_204 : f32 to vector<16x16xf32>
      %584 = arith.select %572, %583, %568 : vector<16x16xi1>, vector<16x16xf32>
      %cst_205 = arith.constant dense<0.000000e+00> : vector<16xf32>
      %585 = vector.multi_reduction <add>, %584, %cst_205 [0] : vector<16x16xf32> to vector<16xf32>
      %586 = vector.shape_cast %585 : vector<16xf32> to vector<1x16xf32>
      %c0_206 = arith.constant 0 : index
      %c0_207 = arith.constant 0 : index
      %587 = vector.load %arg7[%c0_206, %c0_207] : memref<1x16xf32, #tpu.memory_space<vmem>>, vector<1x16xf32>
      tpu.vector_store %arg7[%c0_206, %c0_207], %586 {strides = array<i32>} : memref<1x16xf32, #tpu.memory_space<vmem>>, vector<1x16xf32>,
      %cst_208 = arith.constant 0.000000e+00 : f32
      %588 = vector.broadcast %cst_208 : f32 to vector<1x16xf32>
      %c0_209 = arith.constant 0 : index
      %c0_210 = arith.constant 0 : index
      %589 = vector.load %arg8[%c0_209, %c0_210] : memref<1x16xf32, #tpu.memory_space<vmem>>, vector<1x16xf32>
      tpu.vector_store %arg8[%c0_209, %c0_210], %588 {strides = array<i32>} : memref<1x16xf32, #tpu.memory_space<vmem>>, vector<1x16xf32>,
    } else {
    }
    %c0 = arith.constant 0 : index
    %c0_1 = arith.constant 0 : index
    %3 = vector.load %arg5[%c0, %c0_1] : memref<16x16xf32, #tpu.memory_space<vmem>>, vector<16x16xf32>
    %c0_2 = arith.constant 0 : index
    %c0_3 = arith.constant 0 : index
    %4 = vector.load %arg6[%c0_2, %c0_3] : memref<16x16xf32, #tpu.memory_space<vmem>>, vector<16x16xf32>
    %c0_4 = arith.constant 0 : index
    %c0_5 = arith.constant 0 : index
    %5 = vector.load %arg7[%c0_4, %c0_5] : memref<1x16xf32, #tpu.memory_space<vmem>>, vector<1x16xf32>
    %c16_i32 = arith.constant 16 : i32
    %6 = arith.muli %arg0, %c16_i32 : i32
    %7 = tpu.assume_multiple %6, 16 : i32
    %cst = arith.constant 0.000000e+00 : f32
    %8 = vector.broadcast %cst : f32 to vector<1x16xf32>
    %c0_i32_6 = arith.constant 0 : i32
    %9 = arith.addi %7, %c0_i32_6 : i32
    %10 = arith.index_cast %9 : i32 to index
    %c0_7 = arith.constant 0 : index
    %11 = vector.load %arg5[%10, %c0_7] : memref<16x16xf32, #tpu.memory_space<vmem>>, vector<1x16xf32>
    %12 = arith.index_cast %9 : i32 to index
    %c0_8 = arith.constant 0 : index
    %13 = vector.load %arg6[%12, %c0_8] : memref<16x16xf32, #tpu.memory_space<vmem>>, vector<1x16xf32>
    %14 = vector.broadcast %11 : vector<1x16xf32> to vector<16x16xf32>
    %15 = arith.subf %3, %14 : vector<16x16xf32>
    %cst_9 = arith.constant 5.000000e+02 : f32
    %16 = vector.broadcast %cst_9 : f32 to vector<16x16xf32>
    %17 = arith.mulf %15, %16 : vector<16x16xf32>
    %18 = math.tanh %17 : vector<16x16xf32>
    %cst_10 = arith.constant 1.000000e+00 : f32
    %19 = vector.broadcast %cst_10 : f32 to vector<16x16xf32>
    %20 = arith.addf %19, %18 : vector<16x16xf32>
    %cst_11 = arith.constant 5.000000e-01 : f32
    %21 = vector.broadcast %cst_11 : f32 to vector<16x16xf32>
    %22 = arith.mulf %21, %20 : vector<16x16xf32>
    %23 = arith.mulf %4, %22 : vector<16x16xf32>
    %cst_12 = arith.constant dense<0.000000e+00> : vector<16xf32>
    %24 = vector.multi_reduction <add>, %23, %cst_12 [0] : vector<16x16xf32> to vector<16xf32>
    %25 = vector.shape_cast %24 : vector<16xf32> to vector<1x16xf32>
    %26 = arith.subf %5, %11 : vector<1x16xf32>
    %cst_13 = arith.constant 5.000000e+02 : f32
    %27 = vector.broadcast %cst_13 : f32 to vector<1x16xf32>
    %28 = arith.mulf %26, %27 : vector<1x16xf32>
    %29 = math.tanh %28 : vector<1x16xf32>
    %cst_14 = arith.constant 1.000000e+00 : f32
    %30 = vector.broadcast %cst_14 : f32 to vector<1x16xf32>
    %31 = arith.addf %30, %29 : vector<1x16xf32>
    %cst_15 = arith.constant 5.000000e-01 : f32
    %32 = vector.broadcast %cst_15 : f32 to vector<1x16xf32>
    %33 = arith.mulf %32, %31 : vector<1x16xf32>
    %cst_16 = arith.constant dense<0.000000e+00> : vector<16xf32>
    %34 = vector.multi_reduction <add>, %22, %cst_16 [0] : vector<16x16xf32> to vector<16xf32>
    %35 = vector.shape_cast %34 : vector<16xf32> to vector<1x16xf32>
    %36 = arith.subf %35, %33 : vector<1x16xf32>
    %cst_17 = arith.constant 5.000000e-01 : f32
    %37 = vector.broadcast %cst_17 : f32 to vector<1x16xf32>
    %38 = arith.addf %36, %37 : vector<1x16xf32>
    %39 = tpu.reciprocal %38 {approx = true} : vector<1x16xf32> -> vector<1x16xf32>
    %40 = arith.mulf %25, %39 : vector<1x16xf32>
    %41 = arith.mulf %13, %40 : vector<1x16xf32>
    %42 = arith.addf %8, %41 : vector<1x16xf32>
    %c1_i32 = arith.constant 1 : i32
    %43 = arith.addi %7, %c1_i32 : i32
    %44 = arith.index_cast %43 : i32 to index
    %c0_18 = arith.constant 0 : index
    %45 = vector.load %arg5[%44, %c0_18] : memref<16x16xf32, #tpu.memory_space<vmem>>, vector<1x16xf32>
    %46 = arith.index_cast %43 : i32 to index
    %c0_19 = arith.constant 0 : index
    %47 = vector.load %arg6[%46, %c0_19] : memref<16x16xf32, #tpu.memory_space<vmem>>, vector<1x16xf32>
    %48 = vector.broadcast %45 : vector<1x16xf32> to vector<16x16xf32>
    %49 = arith.subf %3, %48 : vector<16x16xf32>
    %cst_20 = arith.constant 5.000000e+02 : f32
    %50 = vector.broadcast %cst_20 : f32 to vector<16x16xf32>
    %51 = arith.mulf %49, %50 : vector<16x16xf32>
    %52 = math.tanh %51 : vector<16x16xf32>
    %cst_21 = arith.constant 1.000000e+00 : f32
    %53 = vector.broadcast %cst_21 : f32 to vector<16x16xf32>
    %54 = arith.addf %53, %52 : vector<16x16xf32>
    %cst_22 = arith.constant 5.000000e-01 : f32
    %55 = vector.broadcast %cst_22 : f32 to vector<16x16xf32>
    %56 = arith.mulf %55, %54 : vector<16x16xf32>
    %57 = arith.mulf %4, %56 : vector<16x16xf32>
    %cst_23 = arith.constant dense<0.000000e+00> : vector<16xf32>
    %58 = vector.multi_reduction <add>, %57, %cst_23 [0] : vector<16x16xf32> to vector<16xf32>
    %59 = vector.shape_cast %58 : vector<16xf32> to vector<1x16xf32>
    %60 = arith.subf %5, %45 : vector<1x16xf32>
    %cst_24 = arith.constant 5.000000e+02 : f32
    %61 = vector.broadcast %cst_24 : f32 to vector<1x16xf32>
    %62 = arith.mulf %60, %61 : vector<1x16xf32>
    %63 = math.tanh %62 : vector<1x16xf32>
    %cst_25 = arith.constant 1.000000e+00 : f32
    %64 = vector.broadcast %cst_25 : f32 to vector<1x16xf32>
    %65 = arith.addf %64, %63 : vector<1x16xf32>
    %cst_26 = arith.constant 5.000000e-01 : f32
    %66 = vector.broadcast %cst_26 : f32 to vector<1x16xf32>
    %67 = arith.mulf %66, %65 : vector<1x16xf32>
    %cst_27 = arith.constant dense<0.000000e+00> : vector<16xf32>
    %68 = vector.multi_reduction <add>, %56, %cst_27 [0] : vector<16x16xf32> to vector<16xf32>
    %69 = vector.shape_cast %68 : vector<16xf32> to vector<1x16xf32>
    %70 = arith.subf %69, %67 : vector<1x16xf32>
    %cst_28 = arith.constant 5.000000e-01 : f32
    %71 = vector.broadcast %cst_28 : f32 to vector<1x16xf32>
    %72 = arith.addf %70, %71 : vector<1x16xf32>
    %73 = tpu.reciprocal %72 {approx = true} : vector<1x16xf32> -> vector<1x16xf32>
    %74 = arith.mulf %59, %73 : vector<1x16xf32>
    %75 = arith.mulf %47, %74 : vector<1x16xf32>
    %76 = arith.addf %42, %75 : vector<1x16xf32>
    %c2_i32 = arith.constant 2 : i32
    %77 = arith.addi %7, %c2_i32 : i32
    %78 = arith.index_cast %77 : i32 to index
    %c0_29 = arith.constant 0 : index
    %79 = vector.load %arg5[%78, %c0_29] : memref<16x16xf32, #tpu.memory_space<vmem>>, vector<1x16xf32>
    %80 = arith.index_cast %77 : i32 to index
    %c0_30 = arith.constant 0 : index
    %81 = vector.load %arg6[%80, %c0_30] : memref<16x16xf32, #tpu.memory_space<vmem>>, vector<1x16xf32>
    %82 = vector.broadcast %79 : vector<1x16xf32> to vector<16x16xf32>
    %83 = arith.subf %3, %82 : vector<16x16xf32>
    %cst_31 = arith.constant 5.000000e+02 : f32
    %84 = vector.broadcast %cst_31 : f32 to vector<16x16xf32>
    %85 = arith.mulf %83, %84 : vector<16x16xf32>
    %86 = math.tanh %85 : vector<16x16xf32>
    %cst_32 = arith.constant 1.000000e+00 : f32
    %87 = vector.broadcast %cst_32 : f32 to vector<16x16xf32>
    %88 = arith.addf %87, %86 : vector<16x16xf32>
    %cst_33 = arith.constant 5.000000e-01 : f32
    %89 = vector.broadcast %cst_33 : f32 to vector<16x16xf32>
    %90 = arith.mulf %89, %88 : vector<16x16xf32>
    %91 = arith.mulf %4, %90 : vector<16x16xf32>
    %cst_34 = arith.constant dense<0.000000e+00> : vector<16xf32>
    %92 = vector.multi_reduction <add>, %91, %cst_34 [0] : vector<16x16xf32> to vector<16xf32>
    %93 = vector.shape_cast %92 : vector<16xf32> to vector<1x16xf32>
    %94 = arith.subf %5, %79 : vector<1x16xf32>
    %cst_35 = arith.constant 5.000000e+02 : f32
    %95 = vector.broadcast %cst_35 : f32 to vector<1x16xf32>
    %96 = arith.mulf %94, %95 : vector<1x16xf32>
    %97 = math.tanh %96 : vector<1x16xf32>
    %cst_36 = arith.constant 1.000000e+00 : f32
    %98 = vector.broadcast %cst_36 : f32 to vector<1x16xf32>
    %99 = arith.addf %98, %97 : vector<1x16xf32>
    %cst_37 = arith.constant 5.000000e-01 : f32
    %100 = vector.broadcast %cst_37 : f32 to vector<1x16xf32>
    %101 = arith.mulf %100, %99 : vector<1x16xf32>
    %cst_38 = arith.constant dense<0.000000e+00> : vector<16xf32>
    %102 = vector.multi_reduction <add>, %90, %cst_38 [0] : vector<16x16xf32> to vector<16xf32>
    %103 = vector.shape_cast %102 : vector<16xf32> to vector<1x16xf32>
    %104 = arith.subf %103, %101 : vector<1x16xf32>
    %cst_39 = arith.constant 5.000000e-01 : f32
    %105 = vector.broadcast %cst_39 : f32 to vector<1x16xf32>
    %106 = arith.addf %104, %105 : vector<1x16xf32>
    %107 = tpu.reciprocal %106 {approx = true} : vector<1x16xf32> -> vector<1x16xf32>
    %108 = arith.mulf %93, %107 : vector<1x16xf32>
    %109 = arith.mulf %81, %108 : vector<1x16xf32>
    %110 = arith.addf %76, %109 : vector<1x16xf32>
    %c3_i32 = arith.constant 3 : i32
    %111 = arith.addi %7, %c3_i32 : i32
    %112 = arith.index_cast %111 : i32 to index
    %c0_40 = arith.constant 0 : index
    %113 = vector.load %arg5[%112, %c0_40] : memref<16x16xf32, #tpu.memory_space<vmem>>, vector<1x16xf32>
    %114 = arith.index_cast %111 : i32 to index
    %c0_41 = arith.constant 0 : index
    %115 = vector.load %arg6[%114, %c0_41] : memref<16x16xf32, #tpu.memory_space<vmem>>, vector<1x16xf32>
    %116 = vector.broadcast %113 : vector<1x16xf32> to vector<16x16xf32>
    %117 = arith.subf %3, %116 : vector<16x16xf32>
    %cst_42 = arith.constant 5.000000e+02 : f32
    %118 = vector.broadcast %cst_42 : f32 to vector<16x16xf32>
    %119 = arith.mulf %117, %118 : vector<16x16xf32>
    %120 = math.tanh %119 : vector<16x16xf32>
    %cst_43 = arith.constant 1.000000e+00 : f32
    %121 = vector.broadcast %cst_43 : f32 to vector<16x16xf32>
    %122 = arith.addf %121, %120 : vector<16x16xf32>
    %cst_44 = arith.constant 5.000000e-01 : f32
    %123 = vector.broadcast %cst_44 : f32 to vector<16x16xf32>
    %124 = arith.mulf %123, %122 : vector<16x16xf32>
    %125 = arith.mulf %4, %124 : vector<16x16xf32>
    %cst_45 = arith.constant dense<0.000000e+00> : vector<16xf32>
    %126 = vector.multi_reduction <add>, %125, %cst_45 [0] : vector<16x16xf32> to vector<16xf32>
    %127 = vector.shape_cast %126 : vector<16xf32> to vector<1x16xf32>
    %128 = arith.subf %5, %113 : vector<1x16xf32>
    %cst_46 = arith.constant 5.000000e+02 : f32
    %129 = vector.broadcast %cst_46 : f32 to vector<1x16xf32>
    %130 = arith.mulf %128, %129 : vector<1x16xf32>
    %131 = math.tanh %130 : vector<1x16xf32>
    %cst_47 = arith.constant 1.000000e+00 : f32
    %132 = vector.broadcast %cst_47 : f32 to vector<1x16xf32>
    %133 = arith.addf %132, %131 : vector<1x16xf32>
    %cst_48 = arith.constant 5.000000e-01 : f32
    %134 = vector.broadcast %cst_48 : f32 to vector<1x16xf32>
    %135 = arith.mulf %134, %133 : vector<1x16xf32>
    %cst_49 = arith.constant dense<0.000000e+00> : vector<16xf32>
    %136 = vector.multi_reduction <add>, %124, %cst_49 [0] : vector<16x16xf32> to vector<16xf32>
    %137 = vector.shape_cast %136 : vector<16xf32> to vector<1x16xf32>
    %138 = arith.subf %137, %135 : vector<1x16xf32>
    %cst_50 = arith.constant 5.000000e-01 : f32
    %139 = vector.broadcast %cst_50 : f32 to vector<1x16xf32>
    %140 = arith.addf %138, %139 : vector<1x16xf32>
    %141 = tpu.reciprocal %140 {approx = true} : vector<1x16xf32> -> vector<1x16xf32>
    %142 = arith.mulf %127, %141 : vector<1x16xf32>
    %143 = arith.mulf %115, %142 : vector<1x16xf32>
    %144 = arith.addf %110, %143 : vector<1x16xf32>
    %c4_i32 = arith.constant 4 : i32
    %145 = arith.addi %7, %c4_i32 : i32
    %146 = arith.index_cast %145 : i32 to index
    %c0_51 = arith.constant 0 : index
    %147 = vector.load %arg5[%146, %c0_51] : memref<16x16xf32, #tpu.memory_space<vmem>>, vector<1x16xf32>
    %148 = arith.index_cast %145 : i32 to index
    %c0_52 = arith.constant 0 : index
    %149 = vector.load %arg6[%148, %c0_52] : memref<16x16xf32, #tpu.memory_space<vmem>>, vector<1x16xf32>
    %150 = vector.broadcast %147 : vector<1x16xf32> to vector<16x16xf32>
    %151 = arith.subf %3, %150 : vector<16x16xf32>
    %cst_53 = arith.constant 5.000000e+02 : f32
    %152 = vector.broadcast %cst_53 : f32 to vector<16x16xf32>
    %153 = arith.mulf %151, %152 : vector<16x16xf32>
    %154 = math.tanh %153 : vector<16x16xf32>
    %cst_54 = arith.constant 1.000000e+00 : f32
    %155 = vector.broadcast %cst_54 : f32 to vector<16x16xf32>
    %156 = arith.addf %155, %154 : vector<16x16xf32>
    %cst_55 = arith.constant 5.000000e-01 : f32
    %157 = vector.broadcast %cst_55 : f32 to vector<16x16xf32>
    %158 = arith.mulf %157, %156 : vector<16x16xf32>
    %159 = arith.mulf %4, %158 : vector<16x16xf32>
    %cst_56 = arith.constant dense<0.000000e+00> : vector<16xf32>
    %160 = vector.multi_reduction <add>, %159, %cst_56 [0] : vector<16x16xf32> to vector<16xf32>
    %161 = vector.shape_cast %160 : vector<16xf32> to vector<1x16xf32>
    %162 = arith.subf %5, %147 : vector<1x16xf32>
    %cst_57 = arith.constant 5.000000e+02 : f32
    %163 = vector.broadcast %cst_57 : f32 to vector<1x16xf32>
    %164 = arith.mulf %162, %163 : vector<1x16xf32>
    %165 = math.tanh %164 : vector<1x16xf32>
    %cst_58 = arith.constant 1.000000e+00 : f32
    %166 = vector.broadcast %cst_58 : f32 to vector<1x16xf32>
    %167 = arith.addf %166, %165 : vector<1x16xf32>
    %cst_59 = arith.constant 5.000000e-01 : f32
    %168 = vector.broadcast %cst_59 : f32 to vector<1x16xf32>
    %169 = arith.mulf %168, %167 : vector<1x16xf32>
    %cst_60 = arith.constant dense<0.000000e+00> : vector<16xf32>
    %170 = vector.multi_reduction <add>, %158, %cst_60 [0] : vector<16x16xf32> to vector<16xf32>
    %171 = vector.shape_cast %170 : vector<16xf32> to vector<1x16xf32>
    %172 = arith.subf %171, %169 : vector<1x16xf32>
    %cst_61 = arith.constant 5.000000e-01 : f32
    %173 = vector.broadcast %cst_61 : f32 to vector<1x16xf32>
    %174 = arith.addf %172, %173 : vector<1x16xf32>
    %175 = tpu.reciprocal %174 {approx = true} : vector<1x16xf32> -> vector<1x16xf32>
    %176 = arith.mulf %161, %175 : vector<1x16xf32>
    %177 = arith.mulf %149, %176 : vector<1x16xf32>
    %178 = arith.addf %144, %177 : vector<1x16xf32>
    %c5_i32 = arith.constant 5 : i32
    %179 = arith.addi %7, %c5_i32 : i32
    %180 = arith.index_cast %179 : i32 to index
    %c0_62 = arith.constant 0 : index
    %181 = vector.load %arg5[%180, %c0_62] : memref<16x16xf32, #tpu.memory_space<vmem>>, vector<1x16xf32>
    %182 = arith.index_cast %179 : i32 to index
    %c0_63 = arith.constant 0 : index
    %183 = vector.load %arg6[%182, %c0_63] : memref<16x16xf32, #tpu.memory_space<vmem>>, vector<1x16xf32>
    %184 = vector.broadcast %181 : vector<1x16xf32> to vector<16x16xf32>
    %185 = arith.subf %3, %184 : vector<16x16xf32>
    %cst_64 = arith.constant 5.000000e+02 : f32
    %186 = vector.broadcast %cst_64 : f32 to vector<16x16xf32>
    %187 = arith.mulf %185, %186 : vector<16x16xf32>
    %188 = math.tanh %187 : vector<16x16xf32>
    %cst_65 = arith.constant 1.000000e+00 : f32
    %189 = vector.broadcast %cst_65 : f32 to vector<16x16xf32>
    %190 = arith.addf %189, %188 : vector<16x16xf32>
    %cst_66 = arith.constant 5.000000e-01 : f32
    %191 = vector.broadcast %cst_66 : f32 to vector<16x16xf32>
    %192 = arith.mulf %191, %190 : vector<16x16xf32>
    %193 = arith.mulf %4, %192 : vector<16x16xf32>
    %cst_67 = arith.constant dense<0.000000e+00> : vector<16xf32>
    %194 = vector.multi_reduction <add>, %193, %cst_67 [0] : vector<16x16xf32> to vector<16xf32>
    %195 = vector.shape_cast %194 : vector<16xf32> to vector<1x16xf32>
    %196 = arith.subf %5, %181 : vector<1x16xf32>
    %cst_68 = arith.constant 5.000000e+02 : f32
    %197 = vector.broadcast %cst_68 : f32 to vector<1x16xf32>
    %198 = arith.mulf %196, %197 : vector<1x16xf32>
    %199 = math.tanh %198 : vector<1x16xf32>
    %cst_69 = arith.constant 1.000000e+00 : f32
    %200 = vector.broadcast %cst_69 : f32 to vector<1x16xf32>
    %201 = arith.addf %200, %199 : vector<1x16xf32>
    %cst_70 = arith.constant 5.000000e-01 : f32
    %202 = vector.broadcast %cst_70 : f32 to vector<1x16xf32>
    %203 = arith.mulf %202, %201 : vector<1x16xf32>
    %cst_71 = arith.constant dense<0.000000e+00> : vector<16xf32>
    %204 = vector.multi_reduction <add>, %192, %cst_71 [0] : vector<16x16xf32> to vector<16xf32>
    %205 = vector.shape_cast %204 : vector<16xf32> to vector<1x16xf32>
    %206 = arith.subf %205, %203 : vector<1x16xf32>
    %cst_72 = arith.constant 5.000000e-01 : f32
    %207 = vector.broadcast %cst_72 : f32 to vector<1x16xf32>
    %208 = arith.addf %206, %207 : vector<1x16xf32>
    %209 = tpu.reciprocal %208 {approx = true} : vector<1x16xf32> -> vector<1x16xf32>
    %210 = arith.mulf %195, %209 : vector<1x16xf32>
    %211 = arith.mulf %183, %210 : vector<1x16xf32>
    %212 = arith.addf %178, %211 : vector<1x16xf32>
    %c6_i32 = arith.constant 6 : i32
    %213 = arith.addi %7, %c6_i32 : i32
    %214 = arith.index_cast %213 : i32 to index
    %c0_73 = arith.constant 0 : index
    %215 = vector.load %arg5[%214, %c0_73] : memref<16x16xf32, #tpu.memory_space<vmem>>, vector<1x16xf32>
    %216 = arith.index_cast %213 : i32 to index
    %c0_74 = arith.constant 0 : index
    %217 = vector.load %arg6[%216, %c0_74] : memref<16x16xf32, #tpu.memory_space<vmem>>, vector<1x16xf32>
    %218 = vector.broadcast %215 : vector<1x16xf32> to vector<16x16xf32>
    %219 = arith.subf %3, %218 : vector<16x16xf32>
    %cst_75 = arith.constant 5.000000e+02 : f32
    %220 = vector.broadcast %cst_75 : f32 to vector<16x16xf32>
    %221 = arith.mulf %219, %220 : vector<16x16xf32>
    %222 = math.tanh %221 : vector<16x16xf32>
    %cst_76 = arith.constant 1.000000e+00 : f32
    %223 = vector.broadcast %cst_76 : f32 to vector<16x16xf32>
    %224 = arith.addf %223, %222 : vector<16x16xf32>
    %cst_77 = arith.constant 5.000000e-01 : f32
    %225 = vector.broadcast %cst_77 : f32 to vector<16x16xf32>
    %226 = arith.mulf %225, %224 : vector<16x16xf32>
    %227 = arith.mulf %4, %226 : vector<16x16xf32>
    %cst_78 = arith.constant dense<0.000000e+00> : vector<16xf32>
    %228 = vector.multi_reduction <add>, %227, %cst_78 [0] : vector<16x16xf32> to vector<16xf32>
    %229 = vector.shape_cast %228 : vector<16xf32> to vector<1x16xf32>
    %230 = arith.subf %5, %215 : vector<1x16xf32>
    %cst_79 = arith.constant 5.000000e+02 : f32
    %231 = vector.broadcast %cst_79 : f32 to vector<1x16xf32>
    %232 = arith.mulf %230, %231 : vector<1x16xf32>
    %233 = math.tanh %232 : vector<1x16xf32>
    %cst_80 = arith.constant 1.000000e+00 : f32
    %234 = vector.broadcast %cst_80 : f32 to vector<1x16xf32>
    %235 = arith.addf %234, %233 : vector<1x16xf32>
    %cst_81 = arith.constant 5.000000e-01 : f32
    %236 = vector.broadcast %cst_81 : f32 to vector<1x16xf32>
    %237 = arith.mulf %236, %235 : vector<1x16xf32>
    %cst_82 = arith.constant dense<0.000000e+00> : vector<16xf32>
    %238 = vector.multi_reduction <add>, %226, %cst_82 [0] : vector<16x16xf32> to vector<16xf32>
    %239 = vector.shape_cast %238 : vector<16xf32> to vector<1x16xf32>
    %240 = arith.subf %239, %237 : vector<1x16xf32>
    %cst_83 = arith.constant 5.000000e-01 : f32
    %241 = vector.broadcast %cst_83 : f32 to vector<1x16xf32>
    %242 = arith.addf %240, %241 : vector<1x16xf32>
    %243 = tpu.reciprocal %242 {approx = true} : vector<1x16xf32> -> vector<1x16xf32>
    %244 = arith.mulf %229, %243 : vector<1x16xf32>
    %245 = arith.mulf %217, %244 : vector<1x16xf32>
    %246 = arith.addf %212, %245 : vector<1x16xf32>
    %c7_i32 = arith.constant 7 : i32
    %247 = arith.addi %7, %c7_i32 : i32
    %248 = arith.index_cast %247 : i32 to index
    %c0_84 = arith.constant 0 : index
    %249 = vector.load %arg5[%248, %c0_84] : memref<16x16xf32, #tpu.memory_space<vmem>>, vector<1x16xf32>
    %250 = arith.index_cast %247 : i32 to index
    %c0_85 = arith.constant 0 : index
    %251 = vector.load %arg6[%250, %c0_85] : memref<16x16xf32, #tpu.memory_space<vmem>>, vector<1x16xf32>
    %252 = vector.broadcast %249 : vector<1x16xf32> to vector<16x16xf32>
    %253 = arith.subf %3, %252 : vector<16x16xf32>
    %cst_86 = arith.constant 5.000000e+02 : f32
    %254 = vector.broadcast %cst_86 : f32 to vector<16x16xf32>
    %255 = arith.mulf %253, %254 : vector<16x16xf32>
    %256 = math.tanh %255 : vector<16x16xf32>
    %cst_87 = arith.constant 1.000000e+00 : f32
    %257 = vector.broadcast %cst_87 : f32 to vector<16x16xf32>
    %258 = arith.addf %257, %256 : vector<16x16xf32>
    %cst_88 = arith.constant 5.000000e-01 : f32
    %259 = vector.broadcast %cst_88 : f32 to vector<16x16xf32>
    %260 = arith.mulf %259, %258 : vector<16x16xf32>
    %261 = arith.mulf %4, %260 : vector<16x16xf32>
    %cst_89 = arith.constant dense<0.000000e+00> : vector<16xf32>
    %262 = vector.multi_reduction <add>, %261, %cst_89 [0] : vector<16x16xf32> to vector<16xf32>
    %263 = vector.shape_cast %262 : vector<16xf32> to vector<1x16xf32>
    %264 = arith.subf %5, %249 : vector<1x16xf32>
    %cst_90 = arith.constant 5.000000e+02 : f32
    %265 = vector.broadcast %cst_90 : f32 to vector<1x16xf32>
    %266 = arith.mulf %264, %265 : vector<1x16xf32>
    %267 = math.tanh %266 : vector<1x16xf32>
    %cst_91 = arith.constant 1.000000e+00 : f32
    %268 = vector.broadcast %cst_91 : f32 to vector<1x16xf32>
    %269 = arith.addf %268, %267 : vector<1x16xf32>
    %cst_92 = arith.constant 5.000000e-01 : f32
    %270 = vector.broadcast %cst_92 : f32 to vector<1x16xf32>
    %271 = arith.mulf %270, %269 : vector<1x16xf32>
    %cst_93 = arith.constant dense<0.000000e+00> : vector<16xf32>
    %272 = vector.multi_reduction <add>, %260, %cst_93 [0] : vector<16x16xf32> to vector<16xf32>
    %273 = vector.shape_cast %272 : vector<16xf32> to vector<1x16xf32>
    %274 = arith.subf %273, %271 : vector<1x16xf32>
    %cst_94 = arith.constant 5.000000e-01 : f32
    %275 = vector.broadcast %cst_94 : f32 to vector<1x16xf32>
    %276 = arith.addf %274, %275 : vector<1x16xf32>
    %277 = tpu.reciprocal %276 {approx = true} : vector<1x16xf32> -> vector<1x16xf32>
    %278 = arith.mulf %263, %277 : vector<1x16xf32>
    %279 = arith.mulf %251, %278 : vector<1x16xf32>
    %280 = arith.addf %246, %279 : vector<1x16xf32>
    %c8_i32 = arith.constant 8 : i32
    %281 = arith.addi %7, %c8_i32 : i32
    %282 = arith.index_cast %281 : i32 to index
    %c0_95 = arith.constant 0 : index
    %283 = vector.load %arg5[%282, %c0_95] : memref<16x16xf32, #tpu.memory_space<vmem>>, vector<1x16xf32>
    %284 = arith.index_cast %281 : i32 to index
    %c0_96 = arith.constant 0 : index
    %285 = vector.load %arg6[%284, %c0_96] : memref<16x16xf32, #tpu.memory_space<vmem>>, vector<1x16xf32>
    %286 = vector.broadcast %283 : vector<1x16xf32> to vector<16x16xf32>
    %287 = arith.subf %3, %286 : vector<16x16xf32>
    %cst_97 = arith.constant 5.000000e+02 : f32
    %288 = vector.broadcast %cst_97 : f32 to vector<16x16xf32>
    %289 = arith.mulf %287, %288 : vector<16x16xf32>
    %290 = math.tanh %289 : vector<16x16xf32>
    %cst_98 = arith.constant 1.000000e+00 : f32
    %291 = vector.broadcast %cst_98 : f32 to vector<16x16xf32>
    %292 = arith.addf %291, %290 : vector<16x16xf32>
    %cst_99 = arith.constant 5.000000e-01 : f32
    %293 = vector.broadcast %cst_99 : f32 to vector<16x16xf32>
    %294 = arith.mulf %293, %292 : vector<16x16xf32>
    %295 = arith.mulf %4, %294 : vector<16x16xf32>
    %cst_100 = arith.constant dense<0.000000e+00> : vector<16xf32>
    %296 = vector.multi_reduction <add>, %295, %cst_100 [0] : vector<16x16xf32> to vector<16xf32>
    %297 = vector.shape_cast %296 : vector<16xf32> to vector<1x16xf32>
    %298 = arith.subf %5, %283 : vector<1x16xf32>
    %cst_101 = arith.constant 5.000000e+02 : f32
    %299 = vector.broadcast %cst_101 : f32 to vector<1x16xf32>
    %300 = arith.mulf %298, %299 : vector<1x16xf32>
    %301 = math.tanh %300 : vector<1x16xf32>
    %cst_102 = arith.constant 1.000000e+00 : f32
    %302 = vector.broadcast %cst_102 : f32 to vector<1x16xf32>
    %303 = arith.addf %302, %301 : vector<1x16xf32>
    %cst_103 = arith.constant 5.000000e-01 : f32
    %304 = vector.broadcast %cst_103 : f32 to vector<1x16xf32>
    %305 = arith.mulf %304, %303 : vector<1x16xf32>
    %cst_104 = arith.constant dense<0.000000e+00> : vector<16xf32>
    %306 = vector.multi_reduction <add>, %294, %cst_104 [0] : vector<16x16xf32> to vector<16xf32>
    %307 = vector.shape_cast %306 : vector<16xf32> to vector<1x16xf32>
    %308 = arith.subf %307, %305 : vector<1x16xf32>
    %cst_105 = arith.constant 5.000000e-01 : f32
    %309 = vector.broadcast %cst_105 : f32 to vector<1x16xf32>
    %310 = arith.addf %308, %309 : vector<1x16xf32>
    %311 = tpu.reciprocal %310 {approx = true} : vector<1x16xf32> -> vector<1x16xf32>
    %312 = arith.mulf %297, %311 : vector<1x16xf32>
    %313 = arith.mulf %285, %312 : vector<1x16xf32>
    %314 = arith.addf %280, %313 : vector<1x16xf32>
    %c9_i32 = arith.constant 9 : i32
    %315 = arith.addi %7, %c9_i32 : i32
    %316 = arith.index_cast %315 : i32 to index
    %c0_106 = arith.constant 0 : index
    %317 = vector.load %arg5[%316, %c0_106] : memref<16x16xf32, #tpu.memory_space<vmem>>, vector<1x16xf32>
    %318 = arith.index_cast %315 : i32 to index
    %c0_107 = arith.constant 0 : index
    %319 = vector.load %arg6[%318, %c0_107] : memref<16x16xf32, #tpu.memory_space<vmem>>, vector<1x16xf32>
    %320 = vector.broadcast %317 : vector<1x16xf32> to vector<16x16xf32>
    %321 = arith.subf %3, %320 : vector<16x16xf32>
    %cst_108 = arith.constant 5.000000e+02 : f32
    %322 = vector.broadcast %cst_108 : f32 to vector<16x16xf32>
    %323 = arith.mulf %321, %322 : vector<16x16xf32>
    %324 = math.tanh %323 : vector<16x16xf32>
    %cst_109 = arith.constant 1.000000e+00 : f32
    %325 = vector.broadcast %cst_109 : f32 to vector<16x16xf32>
    %326 = arith.addf %325, %324 : vector<16x16xf32>
    %cst_110 = arith.constant 5.000000e-01 : f32
    %327 = vector.broadcast %cst_110 : f32 to vector<16x16xf32>
    %328 = arith.mulf %327, %326 : vector<16x16xf32>
    %329 = arith.mulf %4, %328 : vector<16x16xf32>
    %cst_111 = arith.constant dense<0.000000e+00> : vector<16xf32>
    %330 = vector.multi_reduction <add>, %329, %cst_111 [0] : vector<16x16xf32> to vector<16xf32>
    %331 = vector.shape_cast %330 : vector<16xf32> to vector<1x16xf32>
    %332 = arith.subf %5, %317 : vector<1x16xf32>
    %cst_112 = arith.constant 5.000000e+02 : f32
    %333 = vector.broadcast %cst_112 : f32 to vector<1x16xf32>
    %334 = arith.mulf %332, %333 : vector<1x16xf32>
    %335 = math.tanh %334 : vector<1x16xf32>
    %cst_113 = arith.constant 1.000000e+00 : f32
    %336 = vector.broadcast %cst_113 : f32 to vector<1x16xf32>
    %337 = arith.addf %336, %335 : vector<1x16xf32>
    %cst_114 = arith.constant 5.000000e-01 : f32
    %338 = vector.broadcast %cst_114 : f32 to vector<1x16xf32>
    %339 = arith.mulf %338, %337 : vector<1x16xf32>
    %cst_115 = arith.constant dense<0.000000e+00> : vector<16xf32>
    %340 = vector.multi_reduction <add>, %328, %cst_115 [0] : vector<16x16xf32> to vector<16xf32>
    %341 = vector.shape_cast %340 : vector<16xf32> to vector<1x16xf32>
    %342 = arith.subf %341, %339 : vector<1x16xf32>
    %cst_116 = arith.constant 5.000000e-01 : f32
    %343 = vector.broadcast %cst_116 : f32 to vector<1x16xf32>
    %344 = arith.addf %342, %343 : vector<1x16xf32>
    %345 = tpu.reciprocal %344 {approx = true} : vector<1x16xf32> -> vector<1x16xf32>
    %346 = arith.mulf %331, %345 : vector<1x16xf32>
    %347 = arith.mulf %319, %346 : vector<1x16xf32>
    %348 = arith.addf %314, %347 : vector<1x16xf32>
    %c10_i32 = arith.constant 10 : i32
    %349 = arith.addi %7, %c10_i32 : i32
    %350 = arith.index_cast %349 : i32 to index
    %c0_117 = arith.constant 0 : index
    %351 = vector.load %arg5[%350, %c0_117] : memref<16x16xf32, #tpu.memory_space<vmem>>, vector<1x16xf32>
    %352 = arith.index_cast %349 : i32 to index
    %c0_118 = arith.constant 0 : index
    %353 = vector.load %arg6[%352, %c0_118] : memref<16x16xf32, #tpu.memory_space<vmem>>, vector<1x16xf32>
    %354 = vector.broadcast %351 : vector<1x16xf32> to vector<16x16xf32>
    %355 = arith.subf %3, %354 : vector<16x16xf32>
    %cst_119 = arith.constant 5.000000e+02 : f32
    %356 = vector.broadcast %cst_119 : f32 to vector<16x16xf32>
    %357 = arith.mulf %355, %356 : vector<16x16xf32>
    %358 = math.tanh %357 : vector<16x16xf32>
    %cst_120 = arith.constant 1.000000e+00 : f32
    %359 = vector.broadcast %cst_120 : f32 to vector<16x16xf32>
    %360 = arith.addf %359, %358 : vector<16x16xf32>
    %cst_121 = arith.constant 5.000000e-01 : f32
    %361 = vector.broadcast %cst_121 : f32 to vector<16x16xf32>
    %362 = arith.mulf %361, %360 : vector<16x16xf32>
    %363 = arith.mulf %4, %362 : vector<16x16xf32>
    %cst_122 = arith.constant dense<0.000000e+00> : vector<16xf32>
    %364 = vector.multi_reduction <add>, %363, %cst_122 [0] : vector<16x16xf32> to vector<16xf32>
    %365 = vector.shape_cast %364 : vector<16xf32> to vector<1x16xf32>
    %366 = arith.subf %5, %351 : vector<1x16xf32>
    %cst_123 = arith.constant 5.000000e+02 : f32
    %367 = vector.broadcast %cst_123 : f32 to vector<1x16xf32>
    %368 = arith.mulf %366, %367 : vector<1x16xf32>
    %369 = math.tanh %368 : vector<1x16xf32>
    %cst_124 = arith.constant 1.000000e+00 : f32
    %370 = vector.broadcast %cst_124 : f32 to vector<1x16xf32>
    %371 = arith.addf %370, %369 : vector<1x16xf32>
    %cst_125 = arith.constant 5.000000e-01 : f32
    %372 = vector.broadcast %cst_125 : f32 to vector<1x16xf32>
    %373 = arith.mulf %372, %371 : vector<1x16xf32>
    %cst_126 = arith.constant dense<0.000000e+00> : vector<16xf32>
    %374 = vector.multi_reduction <add>, %362, %cst_126 [0] : vector<16x16xf32> to vector<16xf32>
    %375 = vector.shape_cast %374 : vector<16xf32> to vector<1x16xf32>
    %376 = arith.subf %375, %373 : vector<1x16xf32>
    %cst_127 = arith.constant 5.000000e-01 : f32
    %377 = vector.broadcast %cst_127 : f32 to vector<1x16xf32>
    %378 = arith.addf %376, %377 : vector<1x16xf32>
    %379 = tpu.reciprocal %378 {approx = true} : vector<1x16xf32> -> vector<1x16xf32>
    %380 = arith.mulf %365, %379 : vector<1x16xf32>
    %381 = arith.mulf %353, %380 : vector<1x16xf32>
    %382 = arith.addf %348, %381 : vector<1x16xf32>
    %c11_i32 = arith.constant 11 : i32
    %383 = arith.addi %7, %c11_i32 : i32
    %384 = arith.index_cast %383 : i32 to index
    %c0_128 = arith.constant 0 : index
    %385 = vector.load %arg5[%384, %c0_128] : memref<16x16xf32, #tpu.memory_space<vmem>>, vector<1x16xf32>
    %386 = arith.index_cast %383 : i32 to index
    %c0_129 = arith.constant 0 : index
    %387 = vector.load %arg6[%386, %c0_129] : memref<16x16xf32, #tpu.memory_space<vmem>>, vector<1x16xf32>
    %388 = vector.broadcast %385 : vector<1x16xf32> to vector<16x16xf32>
    %389 = arith.subf %3, %388 : vector<16x16xf32>
    %cst_130 = arith.constant 5.000000e+02 : f32
    %390 = vector.broadcast %cst_130 : f32 to vector<16x16xf32>
    %391 = arith.mulf %389, %390 : vector<16x16xf32>
    %392 = math.tanh %391 : vector<16x16xf32>
    %cst_131 = arith.constant 1.000000e+00 : f32
    %393 = vector.broadcast %cst_131 : f32 to vector<16x16xf32>
    %394 = arith.addf %393, %392 : vector<16x16xf32>
    %cst_132 = arith.constant 5.000000e-01 : f32
    %395 = vector.broadcast %cst_132 : f32 to vector<16x16xf32>
    %396 = arith.mulf %395, %394 : vector<16x16xf32>
    %397 = arith.mulf %4, %396 : vector<16x16xf32>
    %cst_133 = arith.constant dense<0.000000e+00> : vector<16xf32>
    %398 = vector.multi_reduction <add>, %397, %cst_133 [0] : vector<16x16xf32> to vector<16xf32>
    %399 = vector.shape_cast %398 : vector<16xf32> to vector<1x16xf32>
    %400 = arith.subf %5, %385 : vector<1x16xf32>
    %cst_134 = arith.constant 5.000000e+02 : f32
    %401 = vector.broadcast %cst_134 : f32 to vector<1x16xf32>
    %402 = arith.mulf %400, %401 : vector<1x16xf32>
    %403 = math.tanh %402 : vector<1x16xf32>
    %cst_135 = arith.constant 1.000000e+00 : f32
    %404 = vector.broadcast %cst_135 : f32 to vector<1x16xf32>
    %405 = arith.addf %404, %403 : vector<1x16xf32>
    %cst_136 = arith.constant 5.000000e-01 : f32
    %406 = vector.broadcast %cst_136 : f32 to vector<1x16xf32>
    %407 = arith.mulf %406, %405 : vector<1x16xf32>
    %cst_137 = arith.constant dense<0.000000e+00> : vector<16xf32>
    %408 = vector.multi_reduction <add>, %396, %cst_137 [0] : vector<16x16xf32> to vector<16xf32>
    %409 = vector.shape_cast %408 : vector<16xf32> to vector<1x16xf32>
    %410 = arith.subf %409, %407 : vector<1x16xf32>
    %cst_138 = arith.constant 5.000000e-01 : f32
    %411 = vector.broadcast %cst_138 : f32 to vector<1x16xf32>
    %412 = arith.addf %410, %411 : vector<1x16xf32>
    %413 = tpu.reciprocal %412 {approx = true} : vector<1x16xf32> -> vector<1x16xf32>
    %414 = arith.mulf %399, %413 : vector<1x16xf32>
    %415 = arith.mulf %387, %414 : vector<1x16xf32>
    %416 = arith.addf %382, %415 : vector<1x16xf32>
    %c12_i32 = arith.constant 12 : i32
    %417 = arith.addi %7, %c12_i32 : i32
    %418 = arith.index_cast %417 : i32 to index
    %c0_139 = arith.constant 0 : index
    %419 = vector.load %arg5[%418, %c0_139] : memref<16x16xf32, #tpu.memory_space<vmem>>, vector<1x16xf32>
    %420 = arith.index_cast %417 : i32 to index
    %c0_140 = arith.constant 0 : index
    %421 = vector.load %arg6[%420, %c0_140] : memref<16x16xf32, #tpu.memory_space<vmem>>, vector<1x16xf32>
    %422 = vector.broadcast %419 : vector<1x16xf32> to vector<16x16xf32>
    %423 = arith.subf %3, %422 : vector<16x16xf32>
    %cst_141 = arith.constant 5.000000e+02 : f32
    %424 = vector.broadcast %cst_141 : f32 to vector<16x16xf32>
    %425 = arith.mulf %423, %424 : vector<16x16xf32>
    %426 = math.tanh %425 : vector<16x16xf32>
    %cst_142 = arith.constant 1.000000e+00 : f32
    %427 = vector.broadcast %cst_142 : f32 to vector<16x16xf32>
    %428 = arith.addf %427, %426 : vector<16x16xf32>
    %cst_143 = arith.constant 5.000000e-01 : f32
    %429 = vector.broadcast %cst_143 : f32 to vector<16x16xf32>
    %430 = arith.mulf %429, %428 : vector<16x16xf32>
    %431 = arith.mulf %4, %430 : vector<16x16xf32>
    %cst_144 = arith.constant dense<0.000000e+00> : vector<16xf32>
    %432 = vector.multi_reduction <add>, %431, %cst_144 [0] : vector<16x16xf32> to vector<16xf32>
    %433 = vector.shape_cast %432 : vector<16xf32> to vector<1x16xf32>
    %434 = arith.subf %5, %419 : vector<1x16xf32>
    %cst_145 = arith.constant 5.000000e+02 : f32
    %435 = vector.broadcast %cst_145 : f32 to vector<1x16xf32>
    %436 = arith.mulf %434, %435 : vector<1x16xf32>
    %437 = math.tanh %436 : vector<1x16xf32>
    %cst_146 = arith.constant 1.000000e+00 : f32
    %438 = vector.broadcast %cst_146 : f32 to vector<1x16xf32>
    %439 = arith.addf %438, %437 : vector<1x16xf32>
    %cst_147 = arith.constant 5.000000e-01 : f32
    %440 = vector.broadcast %cst_147 : f32 to vector<1x16xf32>
    %441 = arith.mulf %440, %439 : vector<1x16xf32>
    %cst_148 = arith.constant dense<0.000000e+00> : vector<16xf32>
    %442 = vector.multi_reduction <add>, %430, %cst_148 [0] : vector<16x16xf32> to vector<16xf32>
    %443 = vector.shape_cast %442 : vector<16xf32> to vector<1x16xf32>
    %444 = arith.subf %443, %441 : vector<1x16xf32>
    %cst_149 = arith.constant 5.000000e-01 : f32
    %445 = vector.broadcast %cst_149 : f32 to vector<1x16xf32>
    %446 = arith.addf %444, %445 : vector<1x16xf32>
    %447 = tpu.reciprocal %446 {approx = true} : vector<1x16xf32> -> vector<1x16xf32>
    %448 = arith.mulf %433, %447 : vector<1x16xf32>
    %449 = arith.mulf %421, %448 : vector<1x16xf32>
    %450 = arith.addf %416, %449 : vector<1x16xf32>
    %c13_i32 = arith.constant 13 : i32
    %451 = arith.addi %7, %c13_i32 : i32
    %452 = arith.index_cast %451 : i32 to index
    %c0_150 = arith.constant 0 : index
    %453 = vector.load %arg5[%452, %c0_150] : memref<16x16xf32, #tpu.memory_space<vmem>>, vector<1x16xf32>
    %454 = arith.index_cast %451 : i32 to index
    %c0_151 = arith.constant 0 : index
    %455 = vector.load %arg6[%454, %c0_151] : memref<16x16xf32, #tpu.memory_space<vmem>>, vector<1x16xf32>
    %456 = vector.broadcast %453 : vector<1x16xf32> to vector<16x16xf32>
    %457 = arith.subf %3, %456 : vector<16x16xf32>
    %cst_152 = arith.constant 5.000000e+02 : f32
    %458 = vector.broadcast %cst_152 : f32 to vector<16x16xf32>
    %459 = arith.mulf %457, %458 : vector<16x16xf32>
    %460 = math.tanh %459 : vector<16x16xf32>
    %cst_153 = arith.constant 1.000000e+00 : f32
    %461 = vector.broadcast %cst_153 : f32 to vector<16x16xf32>
    %462 = arith.addf %461, %460 : vector<16x16xf32>
    %cst_154 = arith.constant 5.000000e-01 : f32
    %463 = vector.broadcast %cst_154 : f32 to vector<16x16xf32>
    %464 = arith.mulf %463, %462 : vector<16x16xf32>
    %465 = arith.mulf %4, %464 : vector<16x16xf32>
    %cst_155 = arith.constant dense<0.000000e+00> : vector<16xf32>
    %466 = vector.multi_reduction <add>, %465, %cst_155 [0] : vector<16x16xf32> to vector<16xf32>
    %467 = vector.shape_cast %466 : vector<16xf32> to vector<1x16xf32>
    %468 = arith.subf %5, %453 : vector<1x16xf32>
    %cst_156 = arith.constant 5.000000e+02 : f32
    %469 = vector.broadcast %cst_156 : f32 to vector<1x16xf32>
    %470 = arith.mulf %468, %469 : vector<1x16xf32>
    %471 = math.tanh %470 : vector<1x16xf32>
    %cst_157 = arith.constant 1.000000e+00 : f32
    %472 = vector.broadcast %cst_157 : f32 to vector<1x16xf32>
    %473 = arith.addf %472, %471 : vector<1x16xf32>
    %cst_158 = arith.constant 5.000000e-01 : f32
    %474 = vector.broadcast %cst_158 : f32 to vector<1x16xf32>
    %475 = arith.mulf %474, %473 : vector<1x16xf32>
    %cst_159 = arith.constant dense<0.000000e+00> : vector<16xf32>
    %476 = vector.multi_reduction <add>, %464, %cst_159 [0] : vector<16x16xf32> to vector<16xf32>
    %477 = vector.shape_cast %476 : vector<16xf32> to vector<1x16xf32>
    %478 = arith.subf %477, %475 : vector<1x16xf32>
    %cst_160 = arith.constant 5.000000e-01 : f32
    %479 = vector.broadcast %cst_160 : f32 to vector<1x16xf32>
    %480 = arith.addf %478, %479 : vector<1x16xf32>
    %481 = tpu.reciprocal %480 {approx = true} : vector<1x16xf32> -> vector<1x16xf32>
    %482 = arith.mulf %467, %481 : vector<1x16xf32>
    %483 = arith.mulf %455, %482 : vector<1x16xf32>
    %484 = arith.addf %450, %483 : vector<1x16xf32>
    %c14_i32 = arith.constant 14 : i32
    %485 = arith.addi %7, %c14_i32 : i32
    %486 = arith.index_cast %485 : i32 to index
    %c0_161 = arith.constant 0 : index
    %487 = vector.load %arg5[%486, %c0_161] : memref<16x16xf32, #tpu.memory_space<vmem>>, vector<1x16xf32>
    %488 = arith.index_cast %485 : i32 to index
    %c0_162 = arith.constant 0 : index
    %489 = vector.load %arg6[%488, %c0_162] : memref<16x16xf32, #tpu.memory_space<vmem>>, vector<1x16xf32>
    %490 = vector.broadcast %487 : vector<1x16xf32> to vector<16x16xf32>
    %491 = arith.subf %3, %490 : vector<16x16xf32>
    %cst_163 = arith.constant 5.000000e+02 : f32
    %492 = vector.broadcast %cst_163 : f32 to vector<16x16xf32>
    %493 = arith.mulf %491, %492 : vector<16x16xf32>
    %494 = math.tanh %493 : vector<16x16xf32>
    %cst_164 = arith.constant 1.000000e+00 : f32
    %495 = vector.broadcast %cst_164 : f32 to vector<16x16xf32>
    %496 = arith.addf %495, %494 : vector<16x16xf32>
    %cst_165 = arith.constant 5.000000e-01 : f32
    %497 = vector.broadcast %cst_165 : f32 to vector<16x16xf32>
    %498 = arith.mulf %497, %496 : vector<16x16xf32>
    %499 = arith.mulf %4, %498 : vector<16x16xf32>
    %cst_166 = arith.constant dense<0.000000e+00> : vector<16xf32>
    %500 = vector.multi_reduction <add>, %499, %cst_166 [0] : vector<16x16xf32> to vector<16xf32>
    %501 = vector.shape_cast %500 : vector<16xf32> to vector<1x16xf32>
    %502 = arith.subf %5, %487 : vector<1x16xf32>
    %cst_167 = arith.constant 5.000000e+02 : f32
    %503 = vector.broadcast %cst_167 : f32 to vector<1x16xf32>
    %504 = arith.mulf %502, %503 : vector<1x16xf32>
    %505 = math.tanh %504 : vector<1x16xf32>
    %cst_168 = arith.constant 1.000000e+00 : f32
    %506 = vector.broadcast %cst_168 : f32 to vector<1x16xf32>
    %507 = arith.addf %506, %505 : vector<1x16xf32>
    %cst_169 = arith.constant 5.000000e-01 : f32
    %508 = vector.broadcast %cst_169 : f32 to vector<1x16xf32>
    %509 = arith.mulf %508, %507 : vector<1x16xf32>
    %cst_170 = arith.constant dense<0.000000e+00> : vector<16xf32>
    %510 = vector.multi_reduction <add>, %498, %cst_170 [0] : vector<16x16xf32> to vector<16xf32>
    %511 = vector.shape_cast %510 : vector<16xf32> to vector<1x16xf32>
    %512 = arith.subf %511, %509 : vector<1x16xf32>
    %cst_171 = arith.constant 5.000000e-01 : f32
    %513 = vector.broadcast %cst_171 : f32 to vector<1x16xf32>
    %514 = arith.addf %512, %513 : vector<1x16xf32>
    %515 = tpu.reciprocal %514 {approx = true} : vector<1x16xf32> -> vector<1x16xf32>
    %516 = arith.mulf %501, %515 : vector<1x16xf32>
    %517 = arith.mulf %489, %516 : vector<1x16xf32>
    %518 = arith.addf %484, %517 : vector<1x16xf32>
    %c15_i32 = arith.constant 15 : i32
    %519 = arith.addi %7, %c15_i32 : i32
    %520 = arith.index_cast %519 : i32 to index
    %c0_172 = arith.constant 0 : index
    %521 = vector.load %arg5[%520, %c0_172] : memref<16x16xf32, #tpu.memory_space<vmem>>, vector<1x16xf32>
    %522 = arith.index_cast %519 : i32 to index
    %c0_173 = arith.constant 0 : index
    %523 = vector.load %arg6[%522, %c0_173] : memref<16x16xf32, #tpu.memory_space<vmem>>, vector<1x16xf32>
    %524 = vector.broadcast %521 : vector<1x16xf32> to vector<16x16xf32>
    %525 = arith.subf %3, %524 : vector<16x16xf32>
    %cst_174 = arith.constant 5.000000e+02 : f32
    %526 = vector.broadcast %cst_174 : f32 to vector<16x16xf32>
    %527 = arith.mulf %525, %526 : vector<16x16xf32>
    %528 = math.tanh %527 : vector<16x16xf32>
    %cst_175 = arith.constant 1.000000e+00 : f32
    %529 = vector.broadcast %cst_175 : f32 to vector<16x16xf32>
    %530 = arith.addf %529, %528 : vector<16x16xf32>
    %cst_176 = arith.constant 5.000000e-01 : f32
    %531 = vector.broadcast %cst_176 : f32 to vector<16x16xf32>
    %532 = arith.mulf %531, %530 : vector<16x16xf32>
    %533 = arith.mulf %4, %532 : vector<16x16xf32>
    %cst_177 = arith.constant dense<0.000000e+00> : vector<16xf32>
    %534 = vector.multi_reduction <add>, %533, %cst_177 [0] : vector<16x16xf32> to vector<16xf32>
    %535 = vector.shape_cast %534 : vector<16xf32> to vector<1x16xf32>
    %536 = arith.subf %5, %521 : vector<1x16xf32>
    %cst_178 = arith.constant 5.000000e+02 : f32
    %537 = vector.broadcast %cst_178 : f32 to vector<1x16xf32>
    %538 = arith.mulf %536, %537 : vector<1x16xf32>
    %539 = math.tanh %538 : vector<1x16xf32>
    %cst_179 = arith.constant 1.000000e+00 : f32
    %540 = vector.broadcast %cst_179 : f32 to vector<1x16xf32>
    %541 = arith.addf %540, %539 : vector<1x16xf32>
    %cst_180 = arith.constant 5.000000e-01 : f32
    %542 = vector.broadcast %cst_180 : f32 to vector<1x16xf32>
    %543 = arith.mulf %542, %541 : vector<1x16xf32>
    %cst_181 = arith.constant dense<0.000000e+00> : vector<16xf32>
    %544 = vector.multi_reduction <add>, %532, %cst_181 [0] : vector<16x16xf32> to vector<16xf32>
    %545 = vector.shape_cast %544 : vector<16xf32> to vector<1x16xf32>
    %546 = arith.subf %545, %543 : vector<1x16xf32>
    %cst_182 = arith.constant 5.000000e-01 : f32
    %547 = vector.broadcast %cst_182 : f32 to vector<1x16xf32>
    %548 = arith.addf %546, %547 : vector<1x16xf32>
    %549 = tpu.reciprocal %548 {approx = true} : vector<1x16xf32> -> vector<1x16xf32>
    %550 = arith.mulf %535, %549 : vector<1x16xf32>
    %551 = arith.mulf %523, %550 : vector<1x16xf32>
    %552 = arith.addf %518, %551 : vector<1x16xf32>
    %c16_i32_183 = arith.constant 16 : i32
    %c0_184 = arith.constant 0 : index
    %c0_185 = arith.constant 0 : index
    %553 = vector.load %arg8[%c0_184, %c0_185] : memref<1x16xf32, #tpu.memory_space<vmem>>, vector<1x16xf32>
    %554 = arith.addf %553, %552 : vector<1x16xf32>
    %c0_186 = arith.constant 0 : index
    %c0_187 = arith.constant 0 : index
    %555 = vector.load %arg8[%c0_186, %c0_187] : memref<1x16xf32, #tpu.memory_space<vmem>>, vector<1x16xf32>
    tpu.vector_store %arg8[%c0_186, %c0_187], %554 {strides = array<i32>} : memref<1x16xf32, #tpu.memory_space<vmem>>, vector<1x16xf32>,
    %c0_i32_188 = arith.constant 0 : i32
    %556 = arith.cmpi eq, %arg0, %c0_i32_188 : i32
    %557 = arith.extui %556 : i1 to i32
    %c0_i32_189 = arith.constant 0 : i32
    %558 = arith.cmpi ne, %557, %c0_i32_189 : i32
    scf.if %558 {
      %c0_190 = arith.constant 0 : index
      %c0_191 = arith.constant 0 : index
      %559 = vector.load %arg6[%c0_190, %c0_191] : memref<16x16xf32, #tpu.memory_space<vmem>>, vector<16x16xf32>
      %cst_192 = arith.constant dense<0.000000e+00> : vector<16xf32>
      %560 = vector.multi_reduction <add>, %559, %cst_192 [0] : vector<16x16xf32> to vector<16xf32>
      %561 = vector.shape_cast %560 : vector<16xf32> to vector<1x16xf32>
      %cst_193 = arith.constant 0.000000e+00 : f32
      %562 = vector.broadcast %cst_193 : f32 to vector<1x16xf32>
      %563 = arith.cmpf ogt, %561, %562 : vector<1x16xf32>
      %c0_194 = arith.constant 0 : index
      %c0_195 = arith.constant 0 : index
      %564 = vector.load %arg8[%c0_194, %c0_195] : memref<1x16xf32, #tpu.memory_space<vmem>>, vector<1x16xf32>
      %cst_196 = arith.constant 1.000000e+00 : f32
      %565 = vector.broadcast %cst_196 : f32 to vector<1x16xf32>
      %566 = arith.select %563, %561, %565 : vector<1x16xi1>, vector<1x16xf32>
      %567 = arith.divf %564, %566 : vector<1x16xf32>
      %cst_197 = arith.constant 0.000000e+00 : f32
      %568 = vector.broadcast %cst_197 : f32 to vector<1x16xf32>
      %569 = arith.select %563, %567, %568 : vector<1x16xi1>, vector<1x16xf32>
      %570 = arith.extui %563 : vector<1x16xi1> to vector<1x16xi32>
      %571 = arith.sitofp %570 : vector<1x16xi32> to vector<1x16xf32>
      %572 = vector.shape_cast %571 : vector<1x16xf32> to vector<1x1x16xf32>
      %cst_198 = arith.constant dense<0.000000e+00> : vector<1xf32>
      %573 = vector.multi_reduction <add>, %572, %cst_198 [1, 2] : vector<1x1x16xf32> to vector<1xf32>
      %574 = vector.shape_cast %573 : vector<1xf32> to vector<1x1x1xf32>
      %575 = vector.extract %574[0, 0, 0] : f32 from vector<1x1x1xf32>
      %576 = vector.shape_cast %569 : vector<1x16xf32> to vector<1x1x16xf32>
      %cst_199 = arith.constant dense<0.000000e+00> : vector<1xf32>
      %577 = vector.multi_reduction <add>, %576, %cst_199 [1, 2] : vector<1x1x16xf32> to vector<1xf32>
      %578 = vector.shape_cast %577 : vector<1xf32> to vector<1x1x1xf32>
      %579 = vector.extract %578[0, 0, 0] : f32 from vector<1x1x1xf32>
      %580 = arith.divf %579, %575 : f32
      %cst_200 = arith.constant 1.000000e+00 : f32
      %581 = arith.subf %cst_200, %580 : f32
      %c0_201 = arith.constant 0 : index
      %c0_202 = arith.constant 0 : index
      %582 = memref.load %arg4[%c0_201, %c0_202] : memref<1x1xf32, #tpu.memory_space<smem>>
      memref.store %581, %arg4[%c0_201, %c0_202] : memref<1x1xf32, #tpu.memory_space<smem>>
    } else {
    }
    return
  }
  func.func @transform_0(%arg0: i32) -> (i32, i32) {
    %c0_i32 = arith.constant 0 : i32
    %c0_i32_0 = arith.constant 0 : i32
    %c0_i32_1 = arith.constant 0 : i32
    return %c0_i32, %c0_i32_0 : i32, i32
  }
  func.func @transform_1(%arg0: i32) -> (i32, i32) {
    %c0_i32 = arith.constant 0 : i32
    %c0_i32_0 = arith.constant 0 : i32
    %c0_i32_1 = arith.constant 0 : i32
    return %c0_i32, %c0_i32_0 : i32, i32
  }
  func.func @transform_2(%arg0: i32) -> (i32, i32) {
    %c0_i32 = arith.constant 0 : i32
    %c0_i32_0 = arith.constant 0 : i32
    %c0_i32_1 = arith.constant 0 : i32
    return %c0_i32, %c0_i32_0 : i32, i32
  }
  func.func @transform_3(%arg0: i32) -> (i32, i32) {
    %c0_i32 = arith.constant 0 : i32
    %c0_i32_0 = arith.constant 0 : i32
    %c0_i32_1 = arith.constant 0 : i32
    return %c0_i32, %c0_i32_0 : i32, i32
  }
}

</mosaic_0001>

<llo_original>
// kernel: tpu_custom_call.1
$region0: #{tpu_custom_call.1}
  #allocation0 [shape = 'u32[]', space=smem, size = 0x4, offset = 0x4, fixed_abs, tag = 'smem constant byte address 0x4 - core index']
  #allocation1 [shape = 'u32[72,128]{1,0:T(1,128)}', space=vmem, size = 0x9000, scoped, tag = 'internal scratch']
  #allocation2 [shape = 'f32[16,16]{1,0:T(8,128)}', space=vmem, size = 0x2000, scoped, tag = 'scratch operand']
  #allocation3 [shape = 'f32[16,16]{1,0:T(8,128)}', space=vmem, size = 0x2000, scoped, tag = 'scratch operand']
  #allocation4 [shape = 'f32[1,16]{1,0:T(1,128)}', space=vmem, size = 0x200, scoped, tag = 'scratch operand']
  #allocation5 [shape = 'f32[1,16]{1,0:T(1,128)}', space=vmem, size = 0x200, scoped, tag = 'scratch operand']
  %s0 = inlined_call_operand.vmem [shape: f32[16,32], index: 0, kind: input, shape index: {}]
  %s1 = inlined_call_operand.vmem [shape: s32[16,1], index: 1, kind: input, shape index: {}]
  %s2 = inlined_call_operand.vmem [shape: s32[1,16], index: 2, kind: input, shape index: {}]
  %s3 = inlined_call_operand.hbm [shape: f32[1,1], index: 3, kind: output, shape index: {}]
  %s4 = sld [smem:[#allocation0]]
  $region30: #{tpu_custom_call.1} parent=0
    _
  %s6 = ssub.s32 1, %s4
  %s7 = scalar_select 0, %s6, %s4
  $region1: #{tpu_custom_call.1} parent=0
    #allocation6 [shape = 'u8[512]{0}', space=smem, size = 0x200, scoped, tag = 'output window, operand 0, single buffered']
    #allocation7 [shape = 's32[1]{0}', space=sflag, size = 0x4, scoped, tag = 'scoped memory for tpu_custom_call.1']
    %8 = vsyncpa [#allocation7], 0
    // Predicated region
    $region2: #{tpu_custom_call.1} parent=1 // pred_check
      _
    $region3: #{tpu_custom_call.1} parent=1 // pred_check_branch
      %10 = sbr.rel (0) target = $region5
    $region4: #{tpu_custom_call.1} parent=1 // pred_region
      _
    $region5: #{tpu_custom_call.1} parent=1 // pred_fallthru
      _
    // Predicated region
    $region6: #{tpu_custom_call.1} parent=1 // pred_check
      _
    $region7: #{tpu_custom_call.1} parent=1 // pred_check_branch
      %12 = sbr.rel (0) target = $region9
    $region8: #{tpu_custom_call.1} parent=1 // pred_region
      _
    $region9: #{tpu_custom_call.1} parent=1 // pred_fallthru
      _
    // Predicated region
    $region10: #{tpu_custom_call.1} parent=1 // pred_check
      _
    $region11: #{tpu_custom_call.1} parent=1 // pred_check_branch
      %14 = sbr.rel (0) target = $region13
    $region12: #{tpu_custom_call.1} parent=1 // pred_region
      _
    $region13: #{tpu_custom_call.1} parent=1 // pred_fallthru
      _
    %p15 = scmp.eq.s32.totalorder 0, 0
    // Predicated region
    $region14: #{tpu_custom_call.1} parent=1 // pred_check
      %p16 = pneg %p15
    $region15: #{tpu_custom_call.1} parent=1 // pred_check_branch
      %18 = sbr.rel (%p16) target = $region17
    $region16: #{tpu_custom_call.1} parent=1 // pred_region
      %v19 = vld [vmem:[%s0] sm:$0xff]
      %v20 = vld [vmem:[%s0 + $0x8] sm:$0xff]
      %v21 = vmul.f32 %v19, %v19
      %v22 = vmul.f32 %v20, %v20
      %vm23 = vcmask 261120
      %v24 = vsel %vm23, %v21, 0.0
      %25 = vadd.xlane.f32.xlu0 %v24
      %v26 = vpop.xlane.xlu0 %25
      %v27 = vsel %vm23, %v22, 0.0
      %28 = vadd.xlane.f32.xlu0 %v27
      %v29 = vpop.xlane.xlu0 %28
      %v30 = vrsqrt.pop %v26
      %v31 = vmul.f32 %v30, %v26
      %v32 = vmul.f32 %v31, %v30
      %v33 = vmul.f32 0.5, %v32
      %v34 = vsub.f32 1.5, %v33
      %v35 = vmul.f32 %v30, %v34
      %v36 = vmul.f32 %v26, %v35
      %vm37 = vcmp.eq.f32.partialorder %v26, inf
      %v38 = vsel %vm37, %v26, %v36
      %vm39 = vcmp.eq.f32.partialorder %v26, 0.0
      %v40 = vand.u32 %v26, 2147483648
      %v41 = vsel %vm39, %v40, %v38
      %v42 = vrsqrt.pop %v29
      %v43 = vmul.f32 %v42, %v29
      %v44 = vmul.f32 %v43, %v42
      %v45 = vmul.f32 0.5, %v44
      %v46 = vsub.f32 1.5, %v45
      %v47 = vmul.f32 %v42, %v46
      %v48 = vmul.f32 %v29, %v47
      %vm49 = vcmp.eq.f32.partialorder %v29, inf
      %v50 = vsel %vm49, %v29, %v48
      %vm51 = vcmp.eq.f32.partialorder %v29, 0.0
      %v52 = vand.u32 %v29, 2147483648
      %v53 = vsel %vm51, %v52, %v50
      %v54 = vmax.f32 %v41, 1e-08
      %v55 = vmax.f32 %v53, 1e-08
      %v56 = vrcp.pop %v54
      %v57 = vmul.f32 %v54, %v56
      %v58 = vsub.f32 1.0, %v57
      %v59 = vmul.f32 %v56, %v58
      %v60 = vadd.f32 %v56, %v59
      %vm61 = vweird.f32 %v54
      %vm62 = vweird.f32 %v56
      %vm63 = vmor %vm61, %vm62
      %v64 = vsel %vm63, %v56, %v60
      %v65 = vand.u32 2147483647, %v54
      %vm66 = vcmp.eq.f32.partialorder %v65, 8.507059e+37
      %v67 = vand.u32 %v54, 2147483648
      %v68 = vor.u32 1.1754944e-38, %v67
      %v69 = vsel %vm66, %v68, %v64
      %v70 = vmul.f32 %v19, %v69
      %v71 = vrcp.pop %v55
      %v72 = vmul.f32 %v55, %v71
      %v73 = vsub.f32 1.0, %v72
      %v74 = vmul.f32 %v71, %v73
      %v75 = vadd.f32 %v71, %v74
      %vm76 = vweird.f32 %v55
      %vm77 = vweird.f32 %v71
      %vm78 = vmor %vm76, %vm77
      %v79 = vsel %vm78, %v71, %v75
      %v80 = vand.u32 2147483647, %v55
      %vm81 = vcmp.eq.f32.partialorder %v80, 8.507059e+37
      %v82 = vand.u32 %v55, 2147483648
      %v83 = vor.u32 1.1754944e-38, %v82
      %v84 = vsel %vm81, %v83, %v79
      %v85 = vmul.f32 %v20, %v84
      %v87 = vsel %vm23, %v70, 0
      %v90 = vsel %vm23, %v85, 0
      %92 = vmatpush.xpose.msra.mxu0 0.0
      %93 = vmatpush.xpose.msra.mxu0 0.0
      %94 = vmatpush.xpose.msra.mxu0 0.0
      %95 = vmatpush.xpose.msra.mxu0 0.0
      %96 = vmatpush.xpose.msra.mxu0 0.0
      %97 = vmatpush.xpose.msra.mxu0 0.0
      %98 = vmatpush.xpose.msra.mxu0 0.0
      %99 = vmatpush.xpose.msra.mxu0 0.0
      %100 = vmatpush.xpose.msra.mxu0 0.0
      %101 = vmatpush.xpose.msra.mxu0 0.0
      %102 = vmatpush.xpose.msra.mxu0 0.0
      %103 = vmatpush.xpose.msra.mxu0 0.0
      %104 = vmatpush.xpose.msra.mxu0 0.0
      %105 = vmatpush.xpose.msra.mxu0 0.0
      %106 = vmatpush.xpose.msra.mxu0 %v90
      %107 = vmatpush.xpose.msra.mxu0 %v87
      %108 = vmatmul.f32.gmra.mxu0 %v87
      %v109 = vpop.f32.mrf.mxu0
      %v110 = vadd.f32 0.0, %v109
      %111 = vmatmul.f32.gmra.mxu0 %v90
      %v112 = vpop.f32.mrf.mxu0
      %v113 = vadd.f32 0.0, %v112
      %114 = vdwg.mxu0
      %vm115 = vcmask 130048
      %116 = vst.msk [vmem:[#allocation2] sm:$0xff] %vm115, %v110
      %117 = vst.msk [vmem:[#allocation2 + $0x8] sm:$0xff] %vm115, %v113
      %v118 = vlaneseq
      %v119 = vshrl.u32 %v118, 7
      %v120 = vadd.s32 %v119, 8
      %v121 = vlaneseq
      %v122 = vand.u32 %v121, 127
      %vm123 = vcmp.ne.s32.totalorder %v119, %v122
      %vm124 = vcmp.ne.s32.totalorder %v120, %v122
      %v125 = vld [vmem:[%s1] sm:$0xff]
      %v126 = vld [vmem:[%s1 + $0x8] sm:$0xff]
      %v127 = vld [vmem:[%s2] sm:$0x1]
      %128 = vset.pattern.permute.xlu0 0
      %129 = vperm.xlu0 %128, %v125
      %v130 = vpop.permute.xlu0 %129
      %131 = vset.pattern.permute.xlu0 0
      %132 = vperm.xlu0 %131, %v126
      %v133 = vpop.permute.xlu0 %132
      %v134 = vperm.slane %v127, 0
      %vm135 = vcmp.eq.s32.totalorder %v130, %v134
      %vm136 = vcmp.eq.s32.totalorder %v133, %v134
      %v137 = vsel %vm135, 1, 0
      %v138 = vsel %vm136, 1, 0
      %v139 = vcvt.s32.f32 %v137
      %v140 = vcvt.s32.f32 %v138
      %v141 = vsel %vm123, %v139, 0.0
      %v142 = vsel %vm124, %v140, 0.0
      %143 = vst.msk [vmem:[#allocation3] sm:$0xff] %vm115, %v141
      %144 = vst.msk [vmem:[#allocation3 + $0x8] sm:$0xff] %vm115, %v142
      %v145 = vsel %vm123, 0.0, %v110
      %v146 = vsel %vm124, 0.0, %v113
      %v147 = vsel %vm115, %v145, 0.0
      %v148 = vsel %vm115, %v146, 0.0
      %v149 = vadd.f32 %v147, %v148
      %v150 = vrot.slane %v149, 4
      %v151 = vadd.f32 %v149, %v150
      %v152 = vrot.slane %v151, 2
      %v153 = vadd.f32 %v151, %v152
      %v154 = vrot.slane %v153, 1
      %v155 = vadd.f32 %v153, %v154
      %vm156 = vcmask 122880
      %157 = vst.msk [vmem:[#allocation4] sm:$0x1] %vm156, %v155
      %158 = vst.msk [vmem:[#allocation5] sm:$0x1] %vm156, 0.0
    $region17: #{tpu_custom_call.1} parent=1 // pred_fallthru
      _
    %v159 = vld [vmem:[#allocation2] sm:$0xff]
    %v160 = vld [vmem:[#allocation2 + $0x8] sm:$0xff]
    %v161 = vld [vmem:[#allocation3] sm:$0xff]
    %v162 = vld [vmem:[#allocation3 + $0x8] sm:$0xff]
    %v163 = vld [vmem:[#allocation4] sm:$0x1]
    %s164 = smul.u32 0, 16
    %s165 = scalar_lea.vmem [#allocation2], %s164
    %v166 = vld [vmem:[%s165] sm:$0x1]
    %s167 = scalar_lea.vmem [#allocation3], %s164
    %v168 = vld [vmem:[%s167] sm:$0x1]
    %v169 = vperm.slane %v166, 0
    %v170 = vsub.f32 %v159, %v169
    %v171 = vsub.f32 %v160, %v169
    %v172 = vmul.f32 %v170, 500.0
    %v173 = vmul.f32 %v171, 500.0
    %v174 = vtanh.pop %v172
    %v175 = vtanh.pop %v173
    %v176 = vadd.f32 %v174, 1.0
    %v177 = vadd.f32 %v175, 1.0
    %v178 = vmul.f32 %v176, 0.5
    %v179 = vmul.f32 %v177, 0.5
    %v180 = vmul.f32 %v161, %v178
    %v181 = vmul.f32 %v162, %v179
    %vm182 = vcmask 130048
    %v183 = vsel %vm182, %v180, 0.0
    %v184 = vsel %vm182, %v181, 0.0
    %v185 = vadd.f32 %v183, %v184
    %v186 = vrot.slane %v185, 4
    %v187 = vadd.f32 %v185, %v186
    %v188 = vrot.slane %v187, 2
    %v189 = vadd.f32 %v187, %v188
    %v190 = vrot.slane %v189, 1
    %v191 = vadd.f32 %v189, %v190
    %v192 = vsub.f32 %v163, %v166
    %v193 = vmul.f32 %v192, 500.0
    %v194 = vtanh.pop %v193
    %v195 = vadd.f32 %v194, 1.0
    %v196 = vmul.f32 %v195, 0.5
    %v197 = vsel %vm182, %v178, 0.0
    %v198 = vsel %vm182, %v179, 0.0
    %v199 = vadd.f32 %v197, %v198
    %v200 = vrot.slane %v199, 4
    %v201 = vadd.f32 %v199, %v200
    %v202 = vrot.slane %v201, 2
    %v203 = vadd.f32 %v201, %v202
    %v204 = vrot.slane %v203, 1
    %v205 = vadd.f32 %v203, %v204
    %v206 = vsub.f32 %v205, %v196
    %v207 = vadd.f32 %v206, 0.5
    %v208 = vrcp.pop %v207
    %v209 = vmul.f32 %v191, %v208
    %v210 = vmul.f32 %v168, %v209
    %v211 = vadd.f32 %v210, 0.0
    %s212 = sadd.s32 %s164, 1
    %s213 = scalar_lea.vmem [#allocation2], %s212
    %v214 = vld [vmem:[%s213] sm:$0x1]
    %s215 = scalar_lea.vmem [#allocation3], %s212
    %v216 = vld [vmem:[%s215] sm:$0x1]
    %v217 = vperm.slane %v214, 0
    %v218 = vsub.f32 %v159, %v217
    %v219 = vsub.f32 %v160, %v217
    %v220 = vmul.f32 %v218, 500.0
    %v221 = vmul.f32 %v219, 500.0
    %v222 = vtanh.pop %v220
    %v223 = vtanh.pop %v221
    %v224 = vadd.f32 %v222, 1.0
    %v225 = vadd.f32 %v223, 1.0
    %v226 = vmul.f32 %v224, 0.5
    %v227 = vmul.f32 %v225, 0.5
    %v228 = vmul.f32 %v161, %v226
    %v229 = vmul.f32 %v162, %v227
    %v230 = vsel %vm182, %v228, 0.0
    %v231 = vsel %vm182, %v229, 0.0
    %v232 = vadd.f32 %v230, %v231
    %v233 = vrot.slane %v232, 4
    %v234 = vadd.f32 %v232, %v233
    %v235 = vrot.slane %v234, 2
    %v236 = vadd.f32 %v234, %v235
    %v237 = vrot.slane %v236, 1
    %v238 = vadd.f32 %v236, %v237
    %v239 = vsub.f32 %v163, %v214
    %v240 = vmul.f32 %v239, 500.0
    %v241 = vtanh.pop %v240
    %v242 = vadd.f32 %v241, 1.0
    %v243 = vmul.f32 %v242, 0.5
    %v244 = vsel %vm182, %v226, 0.0
    %v245 = vsel %vm182, %v227, 0.0
    %v246 = vadd.f32 %v244, %v245
    %v247 = vrot.slane %v246, 4
    %v248 = vadd.f32 %v246, %v247
    %v249 = vrot.slane %v248, 2
    %v250 = vadd.f32 %v248, %v249
    %v251 = vrot.slane %v250, 1
    %v252 = vadd.f32 %v250, %v251
    %v253 = vsub.f32 %v252, %v243
    %v254 = vadd.f32 %v253, 0.5
    %v255 = vrcp.pop %v254
    %v256 = vmul.f32 %v238, %v255
    %v257 = vmul.f32 %v216, %v256
    %v258 = vadd.f32 %v211, %v257
    %s259 = sadd.s32 %s164, 2
    %s260 = scalar_lea.vmem [#allocation2], %s259
    %v261 = vld [vmem:[%s260] sm:$0x1]
    %s262 = scalar_lea.vmem [#allocation3], %s259
    %v263 = vld [vmem:[%s262] sm:$0x1]
    %v264 = vperm.slane %v261, 0
    %v265 = vsub.f32 %v159, %v264
    %v266 = vsub.f32 %v160, %v264
    %v267 = vmul.f32 %v265, 500.0
    %v268 = vmul.f32 %v266, 500.0
    %v269 = vtanh.pop %v267
    %v270 = vtanh.pop %v268
    %v271 = vadd.f32 %v269, 1.0
    %v272 = vadd.f32 %v270, 1.0
    %v273 = vmul.f32 %v271, 0.5
    %v274 = vmul.f32 %v272, 0.5
    %v275 = vmul.f32 %v161, %v273
    %v276 = vmul.f32 %v162, %v274
    %v277 = vsel %vm182, %v275, 0.0
    %v278 = vsel %vm182, %v276, 0.0
    %v279 = vadd.f32 %v277, %v278
    %v280 = vrot.slane %v279, 4
    %v281 = vadd.f32 %v279, %v280
    %v282 = vrot.slane %v281, 2
    %v283 = vadd.f32 %v281, %v282
    %v284 = vrot.slane %v283, 1
    %v285 = vadd.f32 %v283, %v284
    %v286 = vsub.f32 %v163, %v261
    %v287 = vmul.f32 %v286, 500.0
    %v288 = vtanh.pop %v287
    %v289 = vadd.f32 %v288, 1.0
    %v290 = vmul.f32 %v289, 0.5
    %v291 = vsel %vm182, %v273, 0.0
    %v292 = vsel %vm182, %v274, 0.0
    %v293 = vadd.f32 %v291, %v292
    %v294 = vrot.slane %v293, 4
    %v295 = vadd.f32 %v293, %v294
    %v296 = vrot.slane %v295, 2
    %v297 = vadd.f32 %v295, %v296
    %v298 = vrot.slane %v297, 1
    %v299 = vadd.f32 %v297, %v298
    %v300 = vsub.f32 %v299, %v290
    %v301 = vadd.f32 %v300, 0.5
    %v302 = vrcp.pop %v301
    %v303 = vmul.f32 %v285, %v302
    %v304 = vmul.f32 %v263, %v303
    %v305 = vadd.f32 %v258, %v304
    %s306 = sadd.s32 %s164, 3
    %s307 = scalar_lea.vmem [#allocation2], %s306
    %v308 = vld [vmem:[%s307] sm:$0x1]
    %s309 = scalar_lea.vmem [#allocation3], %s306
    %v310 = vld [vmem:[%s309] sm:$0x1]
    %v311 = vperm.slane %v308, 0
    %v312 = vsub.f32 %v159, %v311
    %v313 = vsub.f32 %v160, %v311
    %v314 = vmul.f32 %v312, 500.0
    %v315 = vmul.f32 %v313, 500.0
    %v316 = vtanh.pop %v314
    %v317 = vtanh.pop %v315
    %v318 = vadd.f32 %v316, 1.0
    %v319 = vadd.f32 %v317, 1.0
    %v320 = vmul.f32 %v318, 0.5
    %v321 = vmul.f32 %v319, 0.5
    %v322 = vmul.f32 %v161, %v320
    %v323 = vmul.f32 %v162, %v321
    %v324 = vsel %vm182, %v322, 0.0
    %v325 = vsel %vm182, %v323, 0.0
    %v326 = vadd.f32 %v324, %v325
    %v327 = vrot.slane %v326, 4
    %v328 = vadd.f32 %v326, %v327
    %v329 = vrot.slane %v328, 2
    %v330 = vadd.f32 %v328, %v329
    %v331 = vrot.slane %v330, 1
    %v332 = vadd.f32 %v330, %v331
    %v333 = vsub.f32 %v163, %v308
    %v334 = vmul.f32 %v333, 500.0
    %v335 = vtanh.pop %v334
    %v336 = vadd.f32 %v335, 1.0
    %v337 = vmul.f32 %v336, 0.5
    %v338 = vsel %vm182, %v320, 0.0
    %v339 = vsel %vm182, %v321, 0.0
    %v340 = vadd.f32 %v338, %v339
    %v341 = vrot.slane %v340, 4
    %v342 = vadd.f32 %v340, %v341
    %v343 = vrot.slane %v342, 2
    %v344 = vadd.f32 %v342, %v343
    %v345 = vrot.slane %v344, 1
    %v346 = vadd.f32 %v344, %v345
    %v347 = vsub.f32 %v346, %v337
    %v348 = vadd.f32 %v347, 0.5
    %v349 = vrcp.pop %v348
    %v350 = vmul.f32 %v332, %v349
    %v351 = vmul.f32 %v310, %v350
    %v352 = vadd.f32 %v305, %v351
    %s353 = sadd.s32 %s164, 4
    %s354 = scalar_lea.vmem [#allocation2], %s353
    %v355 = vld [vmem:[%s354] sm:$0x1]
    %s356 = scalar_lea.vmem [#allocation3], %s353
    %v357 = vld [vmem:[%s356] sm:$0x1]
    %v358 = vperm.slane %v355, 0
    %v359 = vsub.f32 %v159, %v358
    %v360 = vsub.f32 %v160, %v358
    %v361 = vmul.f32 %v359, 500.0
    %v362 = vmul.f32 %v360, 500.0
    %v363 = vtanh.pop %v361
    %v364 = vtanh.pop %v362
    %v365 = vadd.f32 %v363, 1.0
    %v366 = vadd.f32 %v364, 1.0
    %v367 = vmul.f32 %v365, 0.5
    %v368 = vmul.f32 %v366, 0.5
    %v369 = vmul.f32 %v161, %v367
    %v370 = vmul.f32 %v162, %v368
    %v371 = vsel %vm182, %v369, 0.0
    %v372 = vsel %vm182, %v370, 0.0
    %v373 = vadd.f32 %v371, %v372
    %v374 = vrot.slane %v373, 4
    %v375 = vadd.f32 %v373, %v374
    %v376 = vrot.slane %v375, 2
    %v377 = vadd.f32 %v375, %v376
    %v378 = vrot.slane %v377, 1
    %v379 = vadd.f32 %v377, %v378
    %v380 = vsub.f32 %v163, %v355
    %v381 = vmul.f32 %v380, 500.0
    %v382 = vtanh.pop %v381
    %v383 = vadd.f32 %v382, 1.0
    %v384 = vmul.f32 %v383, 0.5
    %v385 = vsel %vm182, %v367, 0.0
    %v386 = vsel %vm182, %v368, 0.0
    %v387 = vadd.f32 %v385, %v386
    %v388 = vrot.slane %v387, 4
    %v389 = vadd.f32 %v387, %v388
    %v390 = vrot.slane %v389, 2
    %v391 = vadd.f32 %v389, %v390
    %v392 = vrot.slane %v391, 1
    %v393 = vadd.f32 %v391, %v392
    %v394 = vsub.f32 %v393, %v384
    %v395 = vadd.f32 %v394, 0.5
    %v396 = vrcp.pop %v395
    %v397 = vmul.f32 %v379, %v396
    %v398 = vmul.f32 %v357, %v397
    %v399 = vadd.f32 %v352, %v398
    %s400 = sadd.s32 %s164, 5
    %s401 = scalar_lea.vmem [#allocation2], %s400
    %v402 = vld [vmem:[%s401] sm:$0x1]
    %s403 = scalar_lea.vmem [#allocation3], %s400
    %v404 = vld [vmem:[%s403] sm:$0x1]
    %v405 = vperm.slane %v402, 0
    %v406 = vsub.f32 %v159, %v405
    %v407 = vsub.f32 %v160, %v405
    %v408 = vmul.f32 %v406, 500.0
    %v409 = vmul.f32 %v407, 500.0
    %v410 = vtanh.pop %v408
    %v411 = vtanh.pop %v409
    %v412 = vadd.f32 %v410, 1.0
    %v413 = vadd.f32 %v411, 1.0
    %v414 = vmul.f32 %v412, 0.5
    %v415 = vmul.f32 %v413, 0.5
    %v416 = vmul.f32 %v161, %v414
    %v417 = vmul.f32 %v162, %v415
    %v418 = vsel %vm182, %v416, 0.0
    %v419 = vsel %vm182, %v417, 0.0
    %v420 = vadd.f32 %v418, %v419
    %v421 = vrot.slane %v420, 4
    %v422 = vadd.f32 %v420, %v421
    %v423 = vrot.slane %v422, 2
    %v424 = vadd.f32 %v422, %v423
    %v425 = vrot.slane %v424, 1
    %v426 = vadd.f32 %v424, %v425
    %v427 = vsub.f32 %v163, %v402
    %v428 = vmul.f32 %v427, 500.0
    %v429 = vtanh.pop %v428
    %v430 = vadd.f32 %v429, 1.0
    %v431 = vmul.f32 %v430, 0.5
    %v432 = vsel %vm182, %v414, 0.0
    %v433 = vsel %vm182, %v415, 0.0
    %v434 = vadd.f32 %v432, %v433
    %v435 = vrot.slane %v434, 4
    %v436 = vadd.f32 %v434, %v435
    %v437 = vrot.slane %v436, 2
    %v438 = vadd.f32 %v436, %v437
    %v439 = vrot.slane %v438, 1
    %v440 = vadd.f32 %v438, %v439
    %v441 = vsub.f32 %v440, %v431
    %v442 = vadd.f32 %v441, 0.5
    %v443 = vrcp.pop %v442
    %v444 = vmul.f32 %v426, %v443
    %v445 = vmul.f32 %v404, %v444
    %v446 = vadd.f32 %v399, %v445
    %s447 = sadd.s32 %s164, 6
    %s448 = scalar_lea.vmem [#allocation2], %s447
    %v449 = vld [vmem:[%s448] sm:$0x1]
    %s450 = scalar_lea.vmem [#allocation3], %s447
    %v451 = vld [vmem:[%s450] sm:$0x1]
    %v452 = vperm.slane %v449, 0
    %v453 = vsub.f32 %v159, %v452
    %v454 = vsub.f32 %v160, %v452
    %v455 = vmul.f32 %v453, 500.0
    %v456 = vmul.f32 %v454, 500.0
    %v457 = vtanh.pop %v455
    %v458 = vtanh.pop %v456
    %v459 = vadd.f32 %v457, 1.0
    %v460 = vadd.f32 %v458, 1.0
    %v461 = vmul.f32 %v459, 0.5
    %v462 = vmul.f32 %v460, 0.5
    %v463 = vmul.f32 %v161, %v461
    %v464 = vmul.f32 %v162, %v462
    %v465 = vsel %vm182, %v463, 0.0
    %v466 = vsel %vm182, %v464, 0.0
    %v467 = vadd.f32 %v465, %v466
    %v468 = vrot.slane %v467, 4
    %v469 = vadd.f32 %v467, %v468
    %v470 = vrot.slane %v469, 2
    %v471 = vadd.f32 %v469, %v470
    %v472 = vrot.slane %v471, 1
    %v473 = vadd.f32 %v471, %v472
    %v474 = vsub.f32 %v163, %v449
    %v475 = vmul.f32 %v474, 500.0
    %v476 = vtanh.pop %v475
    %v477 = vadd.f32 %v476, 1.0
    %v478 = vmul.f32 %v477, 0.5
    %v479 = vsel %vm182, %v461, 0.0
    %v480 = vsel %vm182, %v462, 0.0
    %v481 = vadd.f32 %v479, %v480
    %v482 = vrot.slane %v481, 4
    %v483 = vadd.f32 %v481, %v482
    %v484 = vrot.slane %v483, 2
    %v485 = vadd.f32 %v483, %v484
    %v486 = vrot.slane %v485, 1
    %v487 = vadd.f32 %v485, %v486
    %v488 = vsub.f32 %v487, %v478
    %v489 = vadd.f32 %v488, 0.5
    %v490 = vrcp.pop %v489
    %v491 = vmul.f32 %v473, %v490
    %v492 = vmul.f32 %v451, %v491
    %v493 = vadd.f32 %v446, %v492
    %s494 = sadd.s32 %s164, 7
    %s495 = scalar_lea.vmem [#allocation2], %s494
    %v496 = vld [vmem:[%s495] sm:$0x1]
    %s497 = scalar_lea.vmem [#allocation3], %s494
    %v498 = vld [vmem:[%s497] sm:$0x1]
    %v499 = vperm.slane %v496, 0
    %v500 = vsub.f32 %v159, %v499
    %v501 = vsub.f32 %v160, %v499
    %v502 = vmul.f32 %v500, 500.0
    %v503 = vmul.f32 %v501, 500.0
    %v504 = vtanh.pop %v502
    %v505 = vtanh.pop %v503
    %v506 = vadd.f32 %v504, 1.0
    %v507 = vadd.f32 %v505, 1.0
    %v508 = vmul.f32 %v506, 0.5
    %v509 = vmul.f32 %v507, 0.5
    %v510 = vmul.f32 %v161, %v508
    %v511 = vmul.f32 %v162, %v509
    %v512 = vsel %vm182, %v510, 0.0
    %v513 = vsel %vm182, %v511, 0.0
    %v514 = vadd.f32 %v512, %v513
    %v515 = vrot.slane %v514, 4
    %v516 = vadd.f32 %v514, %v515
    %v517 = vrot.slane %v516, 2
    %v518 = vadd.f32 %v516, %v517
    %v519 = vrot.slane %v518, 1
    %v520 = vadd.f32 %v518, %v519
    %v521 = vsub.f32 %v163, %v496
    %v522 = vmul.f32 %v521, 500.0
    %v523 = vtanh.pop %v522
    %v524 = vadd.f32 %v523, 1.0
    %v525 = vmul.f32 %v524, 0.5
    %v526 = vsel %vm182, %v508, 0.0
    %v527 = vsel %vm182, %v509, 0.0
    %v528 = vadd.f32 %v526, %v527
    %v529 = vrot.slane %v528, 4
    %v530 = vadd.f32 %v528, %v529
    %v531 = vrot.slane %v530, 2
    %v532 = vadd.f32 %v530, %v531
    %v533 = vrot.slane %v532, 1
    %v534 = vadd.f32 %v532, %v533
    %v535 = vsub.f32 %v534, %v525
    %v536 = vadd.f32 %v535, 0.5
    %v537 = vrcp.pop %v536
    %v538 = vmul.f32 %v520, %v537
    %v539 = vmul.f32 %v498, %v538
    %v540 = vadd.f32 %v493, %v539
    %s541 = sadd.s32 %s164, 8
    %s542 = scalar_lea.vmem [#allocation2], %s541
    %v543 = vld [vmem:[%s542] sm:$0x1]
    %s544 = scalar_lea.vmem [#allocation3], %s541
    %v545 = vld [vmem:[%s544] sm:$0x1]
    %v546 = vperm.slane %v543, 0
    %v547 = vsub.f32 %v159, %v546
    %v548 = vsub.f32 %v160, %v546
    %v549 = vmul.f32 %v547, 500.0
    %v550 = vmul.f32 %v548, 500.0
    %v551 = vtanh.pop %v549
    %v552 = vtanh.pop %v550
    %v553 = vadd.f32 %v551, 1.0
    %v554 = vadd.f32 %v552, 1.0
    %v555 = vmul.f32 %v553, 0.5
    %v556 = vmul.f32 %v554, 0.5
    %v557 = vmul.f32 %v161, %v555
    %v558 = vmul.f32 %v162, %v556
    %v559 = vsel %vm182, %v557, 0.0
    %v560 = vsel %vm182, %v558, 0.0
    %v561 = vadd.f32 %v559, %v560
    %v562 = vrot.slane %v561, 4
    %v563 = vadd.f32 %v561, %v562
    %v564 = vrot.slane %v563, 2
    %v565 = vadd.f32 %v563, %v564
    %v566 = vrot.slane %v565, 1
    %v567 = vadd.f32 %v565, %v566
    %v568 = vsub.f32 %v163, %v543
    %v569 = vmul.f32 %v568, 500.0
    %v570 = vtanh.pop %v569
    %v571 = vadd.f32 %v570, 1.0
    %v572 = vmul.f32 %v571, 0.5
    %v573 = vsel %vm182, %v555, 0.0
    %v574 = vsel %vm182, %v556, 0.0
    %v575 = vadd.f32 %v573, %v574
    %v576 = vrot.slane %v575, 4
    %v577 = vadd.f32 %v575, %v576
    %v578 = vrot.slane %v577, 2
    %v579 = vadd.f32 %v577, %v578
    %v580 = vrot.slane %v579, 1
    %v581 = vadd.f32 %v579, %v580
    %v582 = vsub.f32 %v581, %v572
    %v583 = vadd.f32 %v582, 0.5
    %v584 = vrcp.pop %v583
    %v585 = vmul.f32 %v567, %v584
    %v586 = vmul.f32 %v545, %v585
    %v587 = vadd.f32 %v540, %v586
    %s588 = sadd.s32 %s164, 9
    %s589 = scalar_lea.vmem [#allocation2], %s588
    %v590 = vld [vmem:[%s589] sm:$0x1]
    %s591 = scalar_lea.vmem [#allocation3], %s588
    %v592 = vld [vmem:[%s591] sm:$0x1]
    %v593 = vperm.slane %v590, 0
    %v594 = vsub.f32 %v159, %v593
    %v595 = vsub.f32 %v160, %v593
    %v596 = vmul.f32 %v594, 500.0
    %v597 = vmul.f32 %v595, 500.0
    %v598 = vtanh.pop %v596
    %v599 = vtanh.pop %v597
    %v600 = vadd.f32 %v598, 1.0
    %v601 = vadd.f32 %v599, 1.0
    %v602 = vmul.f32 %v600, 0.5
    %v603 = vmul.f32 %v601, 0.5
    %v604 = vmul.f32 %v161, %v602
    %v605 = vmul.f32 %v162, %v603
    %v606 = vsel %vm182, %v604, 0.0
    %v607 = vsel %vm182, %v605, 0.0
    %v608 = vadd.f32 %v606, %v607
    %v609 = vrot.slane %v608, 4
    %v610 = vadd.f32 %v608, %v609
    %v611 = vrot.slane %v610, 2
    %v612 = vadd.f32 %v610, %v611
    %v613 = vrot.slane %v612, 1
    %v614 = vadd.f32 %v612, %v613
    %v615 = vsub.f32 %v163, %v590
    %v616 = vmul.f32 %v615, 500.0
    %v617 = vtanh.pop %v616
    %v618 = vadd.f32 %v617, 1.0
    %v619 = vmul.f32 %v618, 0.5
    %v620 = vsel %vm182, %v602, 0.0
    %v621 = vsel %vm182, %v603, 0.0
    %v622 = vadd.f32 %v620, %v621
    %v623 = vrot.slane %v622, 4
    %v624 = vadd.f32 %v622, %v623
    %v625 = vrot.slane %v624, 2
    %v626 = vadd.f32 %v624, %v625
    %v627 = vrot.slane %v626, 1
    %v628 = vadd.f32 %v626, %v627
    %v629 = vsub.f32 %v628, %v619
    %v630 = vadd.f32 %v629, 0.5
    %v631 = vrcp.pop %v630
    %v632 = vmul.f32 %v614, %v631
    %v633 = vmul.f32 %v592, %v632
    %v634 = vadd.f32 %v587, %v633
    %s635 = sadd.s32 %s164, 10
    %s636 = scalar_lea.vmem [#allocation2], %s635
    %v637 = vld [vmem:[%s636] sm:$0x1]
    %s638 = scalar_lea.vmem [#allocation3], %s635
    %v639 = vld [vmem:[%s638] sm:$0x1]
    %v640 = vperm.slane %v637, 0
    %v641 = vsub.f32 %v159, %v640
    %v642 = vsub.f32 %v160, %v640
    %v643 = vmul.f32 %v641, 500.0
    %v644 = vmul.f32 %v642, 500.0
    %v645 = vtanh.pop %v643
    %v646 = vtanh.pop %v644
    %v647 = vadd.f32 %v645, 1.0
    %v648 = vadd.f32 %v646, 1.0
    %v649 = vmul.f32 %v647, 0.5
    %v650 = vmul.f32 %v648, 0.5
    %v651 = vmul.f32 %v161, %v649
    %v652 = vmul.f32 %v162, %v650
    %v653 = vsel %vm182, %v651, 0.0
    %v654 = vsel %vm182, %v652, 0.0
    %v655 = vadd.f32 %v653, %v654
    %v656 = vrot.slane %v655, 4
    %v657 = vadd.f32 %v655, %v656
    %v658 = vrot.slane %v657, 2
    %v659 = vadd.f32 %v657, %v658
    %v660 = vrot.slane %v659, 1
    %v661 = vadd.f32 %v659, %v660
    %v662 = vsub.f32 %v163, %v637
    %v663 = vmul.f32 %v662, 500.0
    %v664 = vtanh.pop %v663
    %v665 = vadd.f32 %v664, 1.0
    %v666 = vmul.f32 %v665, 0.5
    %v667 = vsel %vm182, %v649, 0.0
    %v668 = vsel %vm182, %v650, 0.0
    %v669 = vadd.f32 %v667, %v668
    %v670 = vrot.slane %v669, 4
    %v671 = vadd.f32 %v669, %v670
    %v672 = vrot.slane %v671, 2
    %v673 = vadd.f32 %v671, %v672
    %v674 = vrot.slane %v673, 1
    %v675 = vadd.f32 %v673, %v674
    %v676 = vsub.f32 %v675, %v666
    %v677 = vadd.f32 %v676, 0.5
    %v678 = vrcp.pop %v677
    %v679 = vmul.f32 %v661, %v678
    %v680 = vmul.f32 %v639, %v679
    %v681 = vadd.f32 %v634, %v680
    %s682 = sadd.s32 %s164, 11
    %s683 = scalar_lea.vmem [#allocation2], %s682
    %v684 = vld [vmem:[%s683] sm:$0x1]
    %s685 = scalar_lea.vmem [#allocation3], %s682
    %v686 = vld [vmem:[%s685] sm:$0x1]
    %v687 = vperm.slane %v684, 0
    %v688 = vsub.f32 %v159, %v687
    %v689 = vsub.f32 %v160, %v687
    %v690 = vmul.f32 %v688, 500.0
    %v691 = vmul.f32 %v689, 500.0
    %v692 = vtanh.pop %v690
    %v693 = vtanh.pop %v691
    %v694 = vadd.f32 %v692, 1.0
    %v695 = vadd.f32 %v693, 1.0
    %v696 = vmul.f32 %v694, 0.5
    %v697 = vmul.f32 %v695, 0.5
    %v698 = vmul.f32 %v161, %v696
    %v699 = vmul.f32 %v162, %v697
    %v700 = vsel %vm182, %v698, 0.0
    %v701 = vsel %vm182, %v699, 0.0
    %v702 = vadd.f32 %v700, %v701
    %v703 = vrot.slane %v702, 4
    %v704 = vadd.f32 %v702, %v703
    %v705 = vrot.slane %v704, 2
    %v706 = vadd.f32 %v704, %v705
    %v707 = vrot.slane %v706, 1
    %v708 = vadd.f32 %v706, %v707
    %v709 = vsub.f32 %v163, %v684
    %v710 = vmul.f32 %v709, 500.0
    %v711 = vtanh.pop %v710
    %v712 = vadd.f32 %v711, 1.0
    %v713 = vmul.f32 %v712, 0.5
    %v714 = vsel %vm182, %v696, 0.0
    %v715 = vsel %vm182, %v697, 0.0
    %v716 = vadd.f32 %v714, %v715
    %v717 = vrot.slane %v716, 4
    %v718 = vadd.f32 %v716, %v717
    %v719 = vrot.slane %v718, 2
    %v720 = vadd.f32 %v718, %v719
    %v721 = vrot.slane %v720, 1
    %v722 = vadd.f32 %v720, %v721
    %v723 = vsub.f32 %v722, %v713
    %v724 = vadd.f32 %v723, 0.5
    %v725 = vrcp.pop %v724
    %v726 = vmul.f32 %v708, %v725
    %v727 = vmul.f32 %v686, %v726
    %v728 = vadd.f32 %v681, %v727
    %s729 = sadd.s32 %s164, 12
    %s730 = scalar_lea.vmem [#allocation2], %s729
    %v731 = vld [vmem:[%s730] sm:$0x1]
    %s732 = scalar_lea.vmem [#allocation3], %s729
    %v733 = vld [vmem:[%s732] sm:$0x1]
    %v734 = vperm.slane %v731, 0
    %v735 = vsub.f32 %v159, %v734
    %v736 = vsub.f32 %v160, %v734
    %v737 = vmul.f32 %v735, 500.0
    %v738 = vmul.f32 %v736, 500.0
    %v739 = vtanh.pop %v737
    %v740 = vtanh.pop %v738
    %v741 = vadd.f32 %v739, 1.0
    %v742 = vadd.f32 %v740, 1.0
    %v743 = vmul.f32 %v741, 0.5
    %v744 = vmul.f32 %v742, 0.5
    %v745 = vmul.f32 %v161, %v743
    %v746 = vmul.f32 %v162, %v744
    %v747 = vsel %vm182, %v745, 0.0
    %v748 = vsel %vm182, %v746, 0.0
    %v749 = vadd.f32 %v747, %v748
    %v750 = vrot.slane %v749, 4
    %v751 = vadd.f32 %v749, %v750
    %v752 = vrot.slane %v751, 2
    %v753 = vadd.f32 %v751, %v752
    %v754 = vrot.slane %v753, 1
    %v755 = vadd.f32 %v753, %v754
    %v756 = vsub.f32 %v163, %v731
    %v757 = vmul.f32 %v756, 500.0
    %v758 = vtanh.pop %v757
    %v759 = vadd.f32 %v758, 1.0
    %v760 = vmul.f32 %v759, 0.5
    %v761 = vsel %vm182, %v743, 0.0
    %v762 = vsel %vm182, %v744, 0.0
    %v763 = vadd.f32 %v761, %v762
    %v764 = vrot.slane %v763, 4
    %v765 = vadd.f32 %v763, %v764
    %v766 = vrot.slane %v765, 2
    %v767 = vadd.f32 %v765, %v766
    %v768 = vrot.slane %v767, 1
    %v769 = vadd.f32 %v767, %v768
    %v770 = vsub.f32 %v769, %v760
    %v771 = vadd.f32 %v770, 0.5
    %v772 = vrcp.pop %v771
    %v773 = vmul.f32 %v755, %v772
    %v774 = vmul.f32 %v733, %v773
    %v775 = vadd.f32 %v728, %v774
    %s776 = sadd.s32 %s164, 13
    %s777 = scalar_lea.vmem [#allocation2], %s776
    %v778 = vld [vmem:[%s777] sm:$0x1]
    %s779 = scalar_lea.vmem [#allocation3], %s776
    %v780 = vld [vmem:[%s779] sm:$0x1]
    %v781 = vperm.slane %v778, 0
    %v782 = vsub.f32 %v159, %v781
    %v783 = vsub.f32 %v160, %v781
    %v784 = vmul.f32 %v782, 500.0
    %v785 = vmul.f32 %v783, 500.0
    %v786 = vtanh.pop %v784
    %v787 = vtanh.pop %v785
    %v788 = vadd.f32 %v786, 1.0
    %v789 = vadd.f32 %v787, 1.0
    %v790 = vmul.f32 %v788, 0.5
    %v791 = vmul.f32 %v789, 0.5
    %v792 = vmul.f32 %v161, %v790
    %v793 = vmul.f32 %v162, %v791
    %v794 = vsel %vm182, %v792, 0.0
    %v795 = vsel %vm182, %v793, 0.0
    %v796 = vadd.f32 %v794, %v795
    %v797 = vrot.slane %v796, 4
    %v798 = vadd.f32 %v796, %v797
    %v799 = vrot.slane %v798, 2
    %v800 = vadd.f32 %v798, %v799
    %v801 = vrot.slane %v800, 1
    %v802 = vadd.f32 %v800, %v801
    %v803 = vsub.f32 %v163, %v778
    %v804 = vmul.f32 %v803, 500.0
    %v805 = vtanh.pop %v804
    %v806 = vadd.f32 %v805, 1.0
    %v807 = vmul.f32 %v806, 0.5
    %v808 = vsel %vm182, %v790, 0.0
    %v809 = vsel %vm182, %v791, 0.0
    %v810 = vadd.f32 %v808, %v809
    %v811 = vrot.slane %v810, 4
    %v812 = vadd.f32 %v810, %v811
    %v813 = vrot.slane %v812, 2
    %v814 = vadd.f32 %v812, %v813
    %v815 = vrot.slane %v814, 1
    %v816 = vadd.f32 %v814, %v815
    %v817 = vsub.f32 %v816, %v807
    %v818 = vadd.f32 %v817, 0.5
    %v819 = vrcp.pop %v818
    %v820 = vmul.f32 %v802, %v819
    %v821 = vmul.f32 %v780, %v820
    %v822 = vadd.f32 %v775, %v821
    %s823 = sadd.s32 %s164, 14
    %s824 = scalar_lea.vmem [#allocation2], %s823
    %v825 = vld [vmem:[%s824] sm:$0x1]
    %s826 = scalar_lea.vmem [#allocation3], %s823
    %v827 = vld [vmem:[%s826] sm:$0x1]
    %v828 = vperm.slane %v825, 0
    %v829 = vsub.f32 %v159, %v828
    %v830 = vsub.f32 %v160, %v828
    %v831 = vmul.f32 %v829, 500.0
    %v832 = vmul.f32 %v830, 500.0
    %v833 = vtanh.pop %v831
    %v834 = vtanh.pop %v832
    %v835 = vadd.f32 %v833, 1.0
    %v836 = vadd.f32 %v834, 1.0
    %v837 = vmul.f32 %v835, 0.5
    %v838 = vmul.f32 %v836, 0.5
    %v839 = vmul.f32 %v161, %v837
    %v840 = vmul.f32 %v162, %v838
    %v841 = vsel %vm182, %v839, 0.0
    %v842 = vsel %vm182, %v840, 0.0
    %v843 = vadd.f32 %v841, %v842
    %v844 = vrot.slane %v843, 4
    %v845 = vadd.f32 %v843, %v844
    %v846 = vrot.slane %v845, 2
    %v847 = vadd.f32 %v845, %v846
    %v848 = vrot.slane %v847, 1
    %v849 = vadd.f32 %v847, %v848
    %v850 = vsub.f32 %v163, %v825
    %v851 = vmul.f32 %v850, 500.0
    %v852 = vtanh.pop %v851
    %v853 = vadd.f32 %v852, 1.0
    %v854 = vmul.f32 %v853, 0.5
    %v855 = vsel %vm182, %v837, 0.0
    %v856 = vsel %vm182, %v838, 0.0
    %v857 = vadd.f32 %v855, %v856
    %v858 = vrot.slane %v857, 4
    %v859 = vadd.f32 %v857, %v858
    %v860 = vrot.slane %v859, 2
    %v861 = vadd.f32 %v859, %v860
    %v862 = vrot.slane %v861, 1
    %v863 = vadd.f32 %v861, %v862
    %v864 = vsub.f32 %v863, %v854
    %v865 = vadd.f32 %v864, 0.5
    %v866 = vrcp.pop %v865
    %v867 = vmul.f32 %v849, %v866
    %v868 = vmul.f32 %v827, %v867
    %v869 = vadd.f32 %v822, %v868
    %s870 = sadd.s32 %s164, 15
    %s871 = scalar_lea.vmem [#allocation2], %s870
    %v872 = vld [vmem:[%s871] sm:$0x1]
    %s873 = scalar_lea.vmem [#allocation3], %s870
    %v874 = vld [vmem:[%s873] sm:$0x1]
    %v875 = vperm.slane %v872, 0
    %v876 = vsub.f32 %v159, %v875
    %v877 = vsub.f32 %v160, %v875
    %v878 = vmul.f32 %v876, 500.0
    %v879 = vmul.f32 %v877, 500.0
    %v880 = vtanh.pop %v878
    %v881 = vtanh.pop %v879
    %v882 = vadd.f32 %v880, 1.0
    %v883 = vadd.f32 %v881, 1.0
    %v884 = vmul.f32 %v882, 0.5
    %v885 = vmul.f32 %v883, 0.5
    %v886 = vmul.f32 %v161, %v884
    %v887 = vmul.f32 %v162, %v885
    %v888 = vsel %vm182, %v886, 0.0
    %v889 = vsel %vm182, %v887, 0.0
    %v890 = vadd.f32 %v888, %v889
    %v891 = vrot.slane %v890, 4
    %v892 = vadd.f32 %v890, %v891
    %v893 = vrot.slane %v892, 2
    %v894 = vadd.f32 %v892, %v893
    %v895 = vrot.slane %v894, 1
    %v896 = vadd.f32 %v894, %v895
    %v897 = vsub.f32 %v163, %v872
    %v898 = vmul.f32 %v897, 500.0
    %v899 = vtanh.pop %v898
    %v900 = vadd.f32 %v899, 1.0
    %v901 = vmul.f32 %v900, 0.5
    %v902 = vsel %vm182, %v884, 0.0
    %v903 = vsel %vm182, %v885, 0.0
    %v904 = vadd.f32 %v902, %v903
    %v905 = vrot.slane %v904, 4
    %v906 = vadd.f32 %v904, %v905
    %v907 = vrot.slane %v906, 2
    %v908 = vadd.f32 %v906, %v907
    %v909 = vrot.slane %v908, 1
    %v910 = vadd.f32 %v908, %v909
    %v911 = vsub.f32 %v910, %v901
    %v912 = vadd.f32 %v911, 0.5
    %v913 = vrcp.pop %v912
    %v914 = vmul.f32 %v896, %v913
    %v915 = vmul.f32 %v874, %v914
    %v916 = vadd.f32 %v869, %v915
    %v917 = vld [vmem:[#allocation5] sm:$0x1]
    %v918 = vadd.f32 %v917, %v916
    %vm919 = vcmask 122880
    %920 = vst.msk [vmem:[#allocation5] sm:$0x1] %vm919, %v918
    // Predicated region
    $region18: #{tpu_custom_call.1} parent=1 // pred_check
      %p921 = pneg %p15
    $region19: #{tpu_custom_call.1} parent=1 // pred_check_branch
      %923 = sbr.rel (%p921) target = $region21
    $region20: #{tpu_custom_call.1} parent=1 // pred_region
      %v924 = vld [vmem:[#allocation3] sm:$0xff]
      %v925 = vld [vmem:[#allocation3 + $0x8] sm:$0xff]
      %v926 = vsel %vm182, %v924, 0.0
      %v927 = vsel %vm182, %v925, 0.0
      %v928 = vadd.f32 %v926, %v927
      %v929 = vrot.slane %v928, 4
      %v930 = vadd.f32 %v928, %v929
      %v931 = vrot.slane %v930, 2
      %v932 = vadd.f32 %v930, %v931
      %v933 = vrot.slane %v932, 1
      %v934 = vadd.f32 %v932, %v933
      %vm935 = vcmp.gt.f32.partialorder %v934, 0.0
      %v936 = vld [vmem:[#allocation5] sm:$0x1]
      %v937 = vsel %vm935, %v934, 1.0
      %v938 = vrcp.pop %v937
      %v939 = vmul.f32 %v937, %v938
      %v940 = vsub.f32 1.0, %v939
      %v941 = vmul.f32 %v938, %v940
      %v942 = vadd.f32 %v938, %v941
      %vm943 = vweird.f32 %v937
      %vm944 = vweird.f32 %v938
      %vm945 = vmor %vm943, %vm944
      %v946 = vsel %vm945, %v938, %v942
      %v947 = vand.u32 2147483647, %v937
      %vm948 = vcmp.eq.f32.partialorder %v947, 8.507059e+37
      %v949 = vand.u32 %v937, 2147483648
      %v950 = vor.u32 1.1754944e-38, %v949
      %v951 = vsel %vm948, %v950, %v946
      %v952 = vmul.f32 %v936, %v951
      %v953 = vsel %vm935, %v952, 0.0
      %v954 = vsel %vm935, 1, 0
      %v955 = vcvt.s32.f32 %v954
      %v956 = vsel %vm919, %v955, 0.0
      %957 = vadd.xlane.f32.xlu0 %v956
      %v958 = vpop.xlane.xlu0 %957
      %v959 = vrot.slane %v958, 4
      %v960 = vadd.f32 %v958, %v959
      %v961 = vrot.slane %v960, 2
      %v962 = vadd.f32 %v960, %v961
      %v963 = vrot.slane %v962, 1
      %v964 = vadd.f32 %v962, %v963
      %s965 = vtos %v964
      %v966 = vsel %vm919, %v953, 0.0
      %967 = vadd.xlane.f32.xlu0 %v966
      %v968 = vpop.xlane.xlu0 %967
      %v969 = vrot.slane %v968, 4
      %v970 = vadd.f32 %v968, %v969
      %v971 = vrot.slane %v970, 2
      %v972 = vadd.f32 %v970, %v971
      %v973 = vrot.slane %v972, 1
      %v974 = vadd.f32 %v972, %v973
      %s975 = vtos %v974
      %v976 = vstv %s965
      %v977 = vrcp.pop %v976
      %v978 = vmul.f32 %v976, %v977
      %v979 = vsub.f32 1.0, %v978
      %v980 = vmul.f32 %v977, %v979
      %v981 = vadd.f32 %v977, %v980
      %vm982 = vweird.f32 %v976
      %vm983 = vweird.f32 %v977
      %vm984 = vmor %vm982, %vm983
      %v985 = vsel %vm984, %v977, %v981
      %v986 = vand.u32 2147483647, %v976
      %vm987 = vcmp.eq.f32.partialorder %v986, 8.507059e+37
      %v988 = vand.u32 %v976, 2147483648
      %v989 = vor.u32 1.1754944e-38, %v988
      %v990 = vsel %vm987, %v989, %v985
      %s991 = vtos %v990
      %s992 = smul.f32 %s975, %s991
      %s993 = ssub.f32 1.0, %s992
      %s994 = scalar_lea.smem [#allocation6], 0
      %995 = sst [smem:[%s994]] %s993
    $region21: #{tpu_custom_call.1} parent=1 // pred_fallthru
      _
    // Predicated region
    $region22: #{tpu_custom_call.1} parent=1 // pred_check
      _
    $region23: #{tpu_custom_call.1} parent=1 // pred_check_branch
      %997 = sbr.rel (0) target = $region25
    $region24: #{tpu_custom_call.1} parent=1 // pred_region
      %999 = vsyncadd [#allocation7], 0
      %s1001 = sshll.u32 %s3, 4
      %s1002 = int_to_ptr.hbm [resolvable:$true] %s1001
      %1004 = dma.smem_to_hbm [#allocation6], 16, %s1002, [#allocation7]
    $region25: #{tpu_custom_call.1} parent=1 // pred_fallthru
      _
    // Predicated region
    $region26: #{tpu_custom_call.1} parent=1 // pred_check
      _
    $region27: #{tpu_custom_call.1} parent=1 // pred_check_branch
      %1006 = sbr.rel (0) target = $region29
    $region28: #{tpu_custom_call.1} parent=1 // pred_region
      %1008 = dma.done [#allocation7], 16
    $region29: #{tpu_custom_call.1} parent=1 // pred_fallthru
      _
    %1009 = sfence
    %1010 = vsyncpa [#allocation7], 1

</llo_original>
